<compile_context>
chip_gen: v6e
topology: v6e:2x2x1
jax: 0.10.0
libtpu: 0.0.40
codegen_flags: <defaults>
</compile_context>

<pallas_src>
from functools import partial

import jax
import jax.numpy as jnp
from jax import lax
from jax.experimental import pallas as pl
from jax.experimental.pallas import tpu as pltpu


def mha_kernel(x_ref, w_ref, o_ref, *, B, T, h, dk, dv):
    # x_ref: (B*T, dm)  -- batch folded into the matmul M-dim
    # w_ref: (dm, h*(2*dk+dv))  -- [Wq*scale | Wk | Wv], all heads, lane-major
    # o_ref: (B*T, h*dv)        -- lane-concat of per-head outputs (torch.cat dim=-1)
    x = x_ref[...]

    # Single fat projection matmul: q/k/v for every head and every batch row at once.
    proj = jnp.dot(x, w_ref[...], preferred_element_type=jnp.float32)  # (B*T, h*(2dk+dv))

    q_off = 0
    k_off = h * dk
    v_off = 2 * h * dk

    for b in range(B):          # static unroll (B small)
        r0, r1 = b * T, (b + 1) * T
        for hh in range(h):     # static unroll (h small)
            q_bh = proj[r0:r1, q_off + hh * dk: q_off + (hh + 1) * dk]   # (T, dk), pre-scaled
            k_bh = proj[r0:r1, k_off + hh * dk: k_off + (hh + 1) * dk]   # (T, dk)
            v_bh = proj[r0:r1, v_off + hh * dv: v_off + (hh + 1) * dv]   # (T, dv)

            # q @ k.T without materializing a transpose through the XLU.
            s = lax.dot_general(q_bh, k_bh, (((1,), (1,)), ((), ())),
                                preferred_element_type=jnp.float32)       # (T, T)

            # Numerically-stabilized softmax over keys, normalization deferred.
            s = s - jnp.max(s, axis=-1, keepdims=True)
            p = jnp.exp(s)                                                # unnormalized probs
            o_raw = jnp.dot(p, v_bh, preferred_element_type=jnp.float32)  # (T, dv)

            denom = jnp.sum(p, axis=-1, keepdims=True)                    # (T, 1)
            r = pl.reciprocal(denom, approx=True)        # EUP vrcp slot (otherwise idle)
            r = r * (2.0 - denom * r)                    # one NR step -> full f32 accuracy

            # Direct lane-slice store; no concat, no long-lived per-head temps.
            o_ref[r0:r1, hh * dv:(hh + 1) * dv] = (o_raw * r).astype(o_ref.dtype)


def multi_head_attention(x, wq, wk, wv):
    """x: (B, T, dm); wq/wk: (h, dm, dk); wv: (h, dm, dv) -> (B, T, h*dv)."""
    B, T, dm = x.shape
    h, _, dk = wq.shape
    dv = wv.shape[-1]

    # Fuse heads lane-wise and stack Q|K|V into one weight; fold the attention
    # scale into the Q block (x @ (Wq*s) == (x @ Wq)*s).  Tiny one-time prep
    # done by XLA outside the kernel.
    scale = jnp.float32(dk) ** jnp.float32(-0.5)
    wq_f = wq.transpose(1, 0, 2).reshape(dm, h * dk) * scale
    wk_f = wk.transpose(1, 0, 2).reshape(dm, h * dk)
    wv_f = wv.transpose(1, 0, 2).reshape(dm, h * dv)
    w_fused = jnp.concatenate([wq_f, wk_f, wv_f], axis=-1)   # (dm, h*(2dk+dv)) = (32, 192)

    # Fold batch into the matmul M-dim; reshape is a free relabel at the XLA level.
    x_flat = x.reshape(B * T, dm)

    wtot = h * (2 * dk + dv)
    flops = 2 * (B * T) * dm * wtot + 2 * B * h * T * T * (dk + dv)
    bytes_accessed = 4 * (x_flat.size + w_fused.size + B * T * h * dv)

    kernel = partial(mha_kernel, B=B, T=T, h=h, dk=dk, dv=dv)

    out = pl.pallas_call(
        kernel,
        out_shape=jax.ShapeDtypeStruct((B * T, h * dv), x.dtype),
        grid_spec=pltpu.PrefetchScalarGridSpec(
            num_scalar_prefetch=0,
            grid=(1,),   # everything fits in VMEM thousands of times over
            in_specs=[
                pl.BlockSpec((B * T, dm), lambda i: (0, 0)),
                pl.BlockSpec((dm, wtot), lambda i: (0, 0)),
            ],
            out_specs=pl.BlockSpec((B * T, h * dv), lambda i: (0, 0)),
        ),
        # Single step -> nothing to parallelize across TCs; on v7x a batch-parallel
        # split only pays once there are >=2 steps per core.
        compiler_params=pltpu.CompilerParams(
            dimension_semantics=("arbitrary",)),
        cost_estimate=pl.CostEstimate(
            flops=flops,
            transcendentals=B * h * T * T,
            bytes_accessed=bytes_accessed),
    )(x_flat, w_fused)

    return out.reshape(B, T, h * dv)


def reference_mha(x, wq, wk, wv):
    # plain-JAX reference for a sanity check
    q = jnp.einsum("btm,hmk->bhtk", x, wq)
    k = jnp.einsum("btm,hmk->bhtk", x, wk)
    v = jnp.einsum("btm,hmv->bhtv", x, wv)
    s = jnp.einsum("bhtk,bhsk->bhts", q, k) * (k.shape[-1] ** -0.5)
    p = jax.nn.softmax(s, axis=-1)
    o = jnp.einsum("bhts,bhsv->bhtv", p, v)
    B, h, T, dv = o.shape
    return o.transpose(0, 2, 1, 3).reshape(B, T, h * dv)


if __name__ == "__main__":
    # small shapes consistent with the module: dm=32, dk=dv=16, h=4, B=2, T=8
    B, T, dm, dk, dv, h = 2, 8, 32, 16, 16, 4

    key = jax.random.PRNGKey(0)
    kx, kq, kk, kv = jax.random.split(key, 4)
    x = jax.random.normal(kx, (B, T, dm), dtype=jnp.float32)
    # deterministic parameter init (stands in for nn.Linear weights, bias=False,
    # already transposed to (h, dm, dk)/(h, dm, dv) so the kernel computes x @ W)
    wq = jax.random.normal(kq, (h, dm, dk), dtype=jnp.float32) * 0.1
    wk = jax.random.normal(kk, (h, dm, dk), dtype=jnp.float32) * 0.1
    wv = jax.random.normal(kv, (h, dm, dv), dtype=jnp.float32) * 0.1

    out = multi_head_attention(x, wq, wk, wv)
    out = jax.block_until_ready(out)

    ref = reference_mha(x, wq, wk, wv)
    assert out.shape == (B, T, h * dv)
    assert jnp.allclose(out, ref, atol=1e-4, rtol=1e-4), "mismatch vs JAX reference"

    print("KERNEL_OK")
</pallas_src>

<mosaic_0001>
module attributes {stable_mosaic.version = 11 : i64} {
  func.func @mha_kernel(%arg0: i32, %arg1: memref<16x32xf32, #tpu.memory_space<vmem>>, %arg2: memref<32x192xf32, #tpu.memory_space<vmem>>, %arg3: memref<16x64xf32, #tpu.memory_space<vmem>>) attributes {dimension_semantics = [#tpu.dimension_semantics<arbitrary>], iteration_bounds = array<i64: 1>, scalar_prefetch = 0 : i64, scratch_operands = 0 : i64, tpu.core_type = #tpu.core_type<tc>, window_params = [{pipeline_mode = #tpu.pipeline_mode<synchronous>, transform_indices = @transform_0, window_bounds = array<i64: 16, 32>}, {pipeline_mode = #tpu.pipeline_mode<synchronous>, transform_indices = @transform_1, window_bounds = array<i64: 32, 192>}, {pipeline_mode = #tpu.pipeline_mode<synchronous>, transform_indices = @transform_2, window_bounds = array<i64: 16, 64>}]} {
    %c0 = arith.constant 0 : index
    %c0_0 = arith.constant 0 : index
    %0 = vector.load %arg1[%c0, %c0_0] : memref<16x32xf32, #tpu.memory_space<vmem>>, vector<16x32xf32>
    %c0_1 = arith.constant 0 : index
    %c0_2 = arith.constant 0 : index
    %1 = vector.load %arg2[%c0_1, %c0_2] : memref<32x192xf32, #tpu.memory_space<vmem>>, vector<32x192xf32>
    %cst = arith.constant dense<0.000000e+00> : vector<16x192xf32>
    %2 = tpu.matmul %0, %1, %cst {dimension_numbers = #tpu.dot_dimension_numbers<[1], [0], [0], [1], [0, 0, 1, 1], [], []>} : vector<16x32xf32>, vector<32x192xf32>, vector<16x192xf32> -> vector<16x192xf32>
    %3 = vector.extract_strided_slice %2 {offsets = [0, 0], sizes = [8, 16], strides = [1, 1]} : vector<16x192xf32> to vector<8x16xf32>
    %4 = vector.extract_strided_slice %2 {offsets = [0, 64], sizes = [8, 16], strides = [1, 1]} : vector<16x192xf32> to vector<8x16xf32>
    %5 = vector.extract_strided_slice %2 {offsets = [0, 128], sizes = [8, 16], strides = [1, 1]} : vector<16x192xf32> to vector<8x16xf32>
    %cst_3 = arith.constant dense<0.000000e+00> : vector<8x8xf32>
    %6 = tpu.matmul %3, %4, %cst_3 {dimension_numbers = #tpu.dot_dimension_numbers<[1], [1], [0], [0], [0, 0, 1, 0], [], []>} : vector<8x16xf32>, vector<8x16xf32>, vector<8x8xf32> -> vector<8x8xf32>
    %cst_4 = arith.constant dense<0xFF800000> : vector<8xf32>
    %7 = vector.multi_reduction <maximumf>, %6, %cst_4 [1] : vector<8x8xf32> to vector<8xf32>
    %8 = vector.shape_cast %7 : vector<8xf32> to vector<8x1xf32>
    %9 = vector.broadcast %8 : vector<8x1xf32> to vector<8x8xf32>
    %10 = arith.subf %6, %9 : vector<8x8xf32>
    %11 = math.exp %10 : vector<8x8xf32>
    %cst_5 = arith.constant dense<0.000000e+00> : vector<8x16xf32>
    %12 = tpu.matmul %11, %5, %cst_5 {dimension_numbers = #tpu.dot_dimension_numbers<[1], [0], [0], [1], [0, 0, 1, 1], [], []>} : vector<8x8xf32>, vector<8x16xf32>, vector<8x16xf32> -> vector<8x16xf32>
    %cst_6 = arith.constant dense<0.000000e+00> : vector<8xf32>
    %13 = vector.multi_reduction <add>, %11, %cst_6 [1] : vector<8x8xf32> to vector<8xf32>
    %14 = vector.shape_cast %13 : vector<8xf32> to vector<8x1xf32>
    %15 = tpu.reciprocal %14 {approx = true} : vector<8x1xf32> -> vector<8x1xf32>
    %16 = arith.mulf %14, %15 : vector<8x1xf32>
    %cst_7 = arith.constant 2.000000e+00 : f32
    %17 = vector.broadcast %cst_7 : f32 to vector<8x1xf32>
    %18 = arith.subf %17, %16 : vector<8x1xf32>
    %19 = arith.mulf %15, %18 : vector<8x1xf32>
    %20 = vector.broadcast %19 : vector<8x1xf32> to vector<8x16xf32>
    %21 = arith.mulf %12, %20 : vector<8x16xf32>
    %c0_8 = arith.constant 0 : index
    %c0_9 = arith.constant 0 : index
    %22 = vector.load %arg3[%c0_8, %c0_9] : memref<16x64xf32, #tpu.memory_space<vmem>>, vector<8x16xf32>
    tpu.vector_store %arg3[%c0_8, %c0_9], %21 {strides = array<i32>} : memref<16x64xf32, #tpu.memory_space<vmem>>, vector<8x16xf32>,
    %23 = vector.extract_strided_slice %2 {offsets = [0, 16], sizes = [8, 16], strides = [1, 1]} : vector<16x192xf32> to vector<8x16xf32>
    %24 = vector.extract_strided_slice %2 {offsets = [0, 80], sizes = [8, 16], strides = [1, 1]} : vector<16x192xf32> to vector<8x16xf32>
    %25 = vector.extract_strided_slice %2 {offsets = [0, 144], sizes = [8, 16], strides = [1, 1]} : vector<16x192xf32> to vector<8x16xf32>
    %cst_10 = arith.constant dense<0.000000e+00> : vector<8x8xf32>
    %26 = tpu.matmul %23, %24, %cst_10 {dimension_numbers = #tpu.dot_dimension_numbers<[1], [1], [0], [0], [0, 0, 1, 0], [], []>} : vector<8x16xf32>, vector<8x16xf32>, vector<8x8xf32> -> vector<8x8xf32>
    %cst_11 = arith.constant dense<0xFF800000> : vector<8xf32>
    %27 = vector.multi_reduction <maximumf>, %26, %cst_11 [1] : vector<8x8xf32> to vector<8xf32>
    %28 = vector.shape_cast %27 : vector<8xf32> to vector<8x1xf32>
    %29 = vector.broadcast %28 : vector<8x1xf32> to vector<8x8xf32>
    %30 = arith.subf %26, %29 : vector<8x8xf32>
    %31 = math.exp %30 : vector<8x8xf32>
    %cst_12 = arith.constant dense<0.000000e+00> : vector<8x16xf32>
    %32 = tpu.matmul %31, %25, %cst_12 {dimension_numbers = #tpu.dot_dimension_numbers<[1], [0], [0], [1], [0, 0, 1, 1], [], []>} : vector<8x8xf32>, vector<8x16xf32>, vector<8x16xf32> -> vector<8x16xf32>
    %cst_13 = arith.constant dense<0.000000e+00> : vector<8xf32>
    %33 = vector.multi_reduction <add>, %31, %cst_13 [1] : vector<8x8xf32> to vector<8xf32>
    %34 = vector.shape_cast %33 : vector<8xf32> to vector<8x1xf32>
    %35 = tpu.reciprocal %34 {approx = true} : vector<8x1xf32> -> vector<8x1xf32>
    %36 = arith.mulf %34, %35 : vector<8x1xf32>
    %cst_14 = arith.constant 2.000000e+00 : f32
    %37 = vector.broadcast %cst_14 : f32 to vector<8x1xf32>
    %38 = arith.subf %37, %36 : vector<8x1xf32>
    %39 = arith.mulf %35, %38 : vector<8x1xf32>
    %40 = vector.broadcast %39 : vector<8x1xf32> to vector<8x16xf32>
    %41 = arith.mulf %32, %40 : vector<8x16xf32>
    %c0_15 = arith.constant 0 : index
    %c16 = arith.constant 16 : index
    %42 = vector.load %arg3[%c0_15, %c16] : memref<16x64xf32, #tpu.memory_space<vmem>>, vector<8x16xf32>
    tpu.vector_store %arg3[%c0_15, %c16], %41 {strides = array<i32>} : memref<16x64xf32, #tpu.memory_space<vmem>>, vector<8x16xf32>,
    %43 = vector.extract_strided_slice %2 {offsets = [0, 32], sizes = [8, 16], strides = [1, 1]} : vector<16x192xf32> to vector<8x16xf32>
    %44 = vector.extract_strided_slice %2 {offsets = [0, 96], sizes = [8, 16], strides = [1, 1]} : vector<16x192xf32> to vector<8x16xf32>
    %45 = vector.extract_strided_slice %2 {offsets = [0, 160], sizes = [8, 16], strides = [1, 1]} : vector<16x192xf32> to vector<8x16xf32>
    %cst_16 = arith.constant dense<0.000000e+00> : vector<8x8xf32>
    %46 = tpu.matmul %43, %44, %cst_16 {dimension_numbers = #tpu.dot_dimension_numbers<[1], [1], [0], [0], [0, 0, 1, 0], [], []>} : vector<8x16xf32>, vector<8x16xf32>, vector<8x8xf32> -> vector<8x8xf32>
    %cst_17 = arith.constant dense<0xFF800000> : vector<8xf32>
    %47 = vector.multi_reduction <maximumf>, %46, %cst_17 [1] : vector<8x8xf32> to vector<8xf32>
    %48 = vector.shape_cast %47 : vector<8xf32> to vector<8x1xf32>
    %49 = vector.broadcast %48 : vector<8x1xf32> to vector<8x8xf32>
    %50 = arith.subf %46, %49 : vector<8x8xf32>
    %51 = math.exp %50 : vector<8x8xf32>
    %cst_18 = arith.constant dense<0.000000e+00> : vector<8x16xf32>
    %52 = tpu.matmul %51, %45, %cst_18 {dimension_numbers = #tpu.dot_dimension_numbers<[1], [0], [0], [1], [0, 0, 1, 1], [], []>} : vector<8x8xf32>, vector<8x16xf32>, vector<8x16xf32> -> vector<8x16xf32>
    %cst_19 = arith.constant dense<0.000000e+00> : vector<8xf32>
    %53 = vector.multi_reduction <add>, %51, %cst_19 [1] : vector<8x8xf32> to vector<8xf32>
    %54 = vector.shape_cast %53 : vector<8xf32> to vector<8x1xf32>
    %55 = tpu.reciprocal %54 {approx = true} : vector<8x1xf32> -> vector<8x1xf32>
    %56 = arith.mulf %54, %55 : vector<8x1xf32>
    %cst_20 = arith.constant 2.000000e+00 : f32
    %57 = vector.broadcast %cst_20 : f32 to vector<8x1xf32>
    %58 = arith.subf %57, %56 : vector<8x1xf32>
    %59 = arith.mulf %55, %58 : vector<8x1xf32>
    %60 = vector.broadcast %59 : vector<8x1xf32> to vector<8x16xf32>
    %61 = arith.mulf %52, %60 : vector<8x16xf32>
    %c0_21 = arith.constant 0 : index
    %c32 = arith.constant 32 : index
    %62 = vector.load %arg3[%c0_21, %c32] : memref<16x64xf32, #tpu.memory_space<vmem>>, vector<8x16xf32>
    tpu.vector_store %arg3[%c0_21, %c32], %61 {strides = array<i32>} : memref<16x64xf32, #tpu.memory_space<vmem>>, vector<8x16xf32>,
    %63 = vector.extract_strided_slice %2 {offsets = [0, 48], sizes = [8, 16], strides = [1, 1]} : vector<16x192xf32> to vector<8x16xf32>
    %64 = vector.extract_strided_slice %2 {offsets = [0, 112], sizes = [8, 16], strides = [1, 1]} : vector<16x192xf32> to vector<8x16xf32>
    %65 = vector.extract_strided_slice %2 {offsets = [0, 176], sizes = [8, 16], strides = [1, 1]} : vector<16x192xf32> to vector<8x16xf32>
    %cst_22 = arith.constant dense<0.000000e+00> : vector<8x8xf32>
    %66 = tpu.matmul %63, %64, %cst_22 {dimension_numbers = #tpu.dot_dimension_numbers<[1], [1], [0], [0], [0, 0, 1, 0], [], []>} : vector<8x16xf32>, vector<8x16xf32>, vector<8x8xf32> -> vector<8x8xf32>
    %cst_23 = arith.constant dense<0xFF800000> : vector<8xf32>
    %67 = vector.multi_reduction <maximumf>, %66, %cst_23 [1] : vector<8x8xf32> to vector<8xf32>
    %68 = vector.shape_cast %67 : vector<8xf32> to vector<8x1xf32>
    %69 = vector.broadcast %68 : vector<8x1xf32> to vector<8x8xf32>
    %70 = arith.subf %66, %69 : vector<8x8xf32>
    %71 = math.exp %70 : vector<8x8xf32>
    %cst_24 = arith.constant dense<0.000000e+00> : vector<8x16xf32>
    %72 = tpu.matmul %71, %65, %cst_24 {dimension_numbers = #tpu.dot_dimension_numbers<[1], [0], [0], [1], [0, 0, 1, 1], [], []>} : vector<8x8xf32>, vector<8x16xf32>, vector<8x16xf32> -> vector<8x16xf32>
    %cst_25 = arith.constant dense<0.000000e+00> : vector<8xf32>
    %73 = vector.multi_reduction <add>, %71, %cst_25 [1] : vector<8x8xf32> to vector<8xf32>
    %74 = vector.shape_cast %73 : vector<8xf32> to vector<8x1xf32>
    %75 = tpu.reciprocal %74 {approx = true} : vector<8x1xf32> -> vector<8x1xf32>
    %76 = arith.mulf %74, %75 : vector<8x1xf32>
    %cst_26 = arith.constant 2.000000e+00 : f32
    %77 = vector.broadcast %cst_26 : f32 to vector<8x1xf32>
    %78 = arith.subf %77, %76 : vector<8x1xf32>
    %79 = arith.mulf %75, %78 : vector<8x1xf32>
    %80 = vector.broadcast %79 : vector<8x1xf32> to vector<8x16xf32>
    %81 = arith.mulf %72, %80 : vector<8x16xf32>
    %c0_27 = arith.constant 0 : index
    %c48 = arith.constant 48 : index
    %82 = vector.load %arg3[%c0_27, %c48] : memref<16x64xf32, #tpu.memory_space<vmem>>, vector<8x16xf32>
    tpu.vector_store %arg3[%c0_27, %c48], %81 {strides = array<i32>} : memref<16x64xf32, #tpu.memory_space<vmem>>, vector<8x16xf32>,
    %83 = vector.extract_strided_slice %2 {offsets = [8, 0], sizes = [8, 16], strides = [1, 1]} : vector<16x192xf32> to vector<8x16xf32>
    %84 = vector.extract_strided_slice %2 {offsets = [8, 64], sizes = [8, 16], strides = [1, 1]} : vector<16x192xf32> to vector<8x16xf32>
    %85 = vector.extract_strided_slice %2 {offsets = [8, 128], sizes = [8, 16], strides = [1, 1]} : vector<16x192xf32> to vector<8x16xf32>
    %cst_28 = arith.constant dense<0.000000e+00> : vector<8x8xf32>
    %86 = tpu.matmul %83, %84, %cst_28 {dimension_numbers = #tpu.dot_dimension_numbers<[1], [1], [0], [0], [0, 0, 1, 0], [], []>} : vector<8x16xf32>, vector<8x16xf32>, vector<8x8xf32> -> vector<8x8xf32>
    %cst_29 = arith.constant dense<0xFF800000> : vector<8xf32>
    %87 = vector.multi_reduction <maximumf>, %86, %cst_29 [1] : vector<8x8xf32> to vector<8xf32>
    %88 = vector.shape_cast %87 : vector<8xf32> to vector<8x1xf32>
    %89 = vector.broadcast %88 : vector<8x1xf32> to vector<8x8xf32>
    %90 = arith.subf %86, %89 : vector<8x8xf32>
    %91 = math.exp %90 : vector<8x8xf32>
    %cst_30 = arith.constant dense<0.000000e+00> : vector<8x16xf32>
    %92 = tpu.matmul %91, %85, %cst_30 {dimension_numbers = #tpu.dot_dimension_numbers<[1], [0], [0], [1], [0, 0, 1, 1], [], []>} : vector<8x8xf32>, vector<8x16xf32>, vector<8x16xf32> -> vector<8x16xf32>
    %cst_31 = arith.constant dense<0.000000e+00> : vector<8xf32>
    %93 = vector.multi_reduction <add>, %91, %cst_31 [1] : vector<8x8xf32> to vector<8xf32>
    %94 = vector.shape_cast %93 : vector<8xf32> to vector<8x1xf32>
    %95 = tpu.reciprocal %94 {approx = true} : vector<8x1xf32> -> vector<8x1xf32>
    %96 = arith.mulf %94, %95 : vector<8x1xf32>
    %cst_32 = arith.constant 2.000000e+00 : f32
    %97 = vector.broadcast %cst_32 : f32 to vector<8x1xf32>
    %98 = arith.subf %97, %96 : vector<8x1xf32>
    %99 = arith.mulf %95, %98 : vector<8x1xf32>
    %100 = vector.broadcast %99 : vector<8x1xf32> to vector<8x16xf32>
    %101 = arith.mulf %92, %100 : vector<8x16xf32>
    %c8 = arith.constant 8 : index
    %c0_33 = arith.constant 0 : index
    %102 = vector.load %arg3[%c8, %c0_33] : memref<16x64xf32, #tpu.memory_space<vmem>>, vector<8x16xf32>
    tpu.vector_store %arg3[%c8, %c0_33], %101 {strides = array<i32>} : memref<16x64xf32, #tpu.memory_space<vmem>>, vector<8x16xf32>,
    %103 = vector.extract_strided_slice %2 {offsets = [8, 16], sizes = [8, 16], strides = [1, 1]} : vector<16x192xf32> to vector<8x16xf32>
    %104 = vector.extract_strided_slice %2 {offsets = [8, 80], sizes = [8, 16], strides = [1, 1]} : vector<16x192xf32> to vector<8x16xf32>
    %105 = vector.extract_strided_slice %2 {offsets = [8, 144], sizes = [8, 16], strides = [1, 1]} : vector<16x192xf32> to vector<8x16xf32>
    %cst_34 = arith.constant dense<0.000000e+00> : vector<8x8xf32>
    %106 = tpu.matmul %103, %104, %cst_34 {dimension_numbers = #tpu.dot_dimension_numbers<[1], [1], [0], [0], [0, 0, 1, 0], [], []>} : vector<8x16xf32>, vector<8x16xf32>, vector<8x8xf32> -> vector<8x8xf32>
    %cst_35 = arith.constant dense<0xFF800000> : vector<8xf32>
    %107 = vector.multi_reduction <maximumf>, %106, %cst_35 [1] : vector<8x8xf32> to vector<8xf32>
    %108 = vector.shape_cast %107 : vector<8xf32> to vector<8x1xf32>
    %109 = vector.broadcast %108 : vector<8x1xf32> to vector<8x8xf32>
    %110 = arith.subf %106, %109 : vector<8x8xf32>
    %111 = math.exp %110 : vector<8x8xf32>
    %cst_36 = arith.constant dense<0.000000e+00> : vector<8x16xf32>
    %112 = tpu.matmul %111, %105, %cst_36 {dimension_numbers = #tpu.dot_dimension_numbers<[1], [0], [0], [1], [0, 0, 1, 1], [], []>} : vector<8x8xf32>, vector<8x16xf32>, vector<8x16xf32> -> vector<8x16xf32>
    %cst_37 = arith.constant dense<0.000000e+00> : vector<8xf32>
    %113 = vector.multi_reduction <add>, %111, %cst_37 [1] : vector<8x8xf32> to vector<8xf32>
    %114 = vector.shape_cast %113 : vector<8xf32> to vector<8x1xf32>
    %115 = tpu.reciprocal %114 {approx = true} : vector<8x1xf32> -> vector<8x1xf32>
    %116 = arith.mulf %114, %115 : vector<8x1xf32>
    %cst_38 = arith.constant 2.000000e+00 : f32
    %117 = vector.broadcast %cst_38 : f32 to vector<8x1xf32>
    %118 = arith.subf %117, %116 : vector<8x1xf32>
    %119 = arith.mulf %115, %118 : vector<8x1xf32>
    %120 = vector.broadcast %119 : vector<8x1xf32> to vector<8x16xf32>
    %121 = arith.mulf %112, %120 : vector<8x16xf32>
    %c8_39 = arith.constant 8 : index
    %c16_40 = arith.constant 16 : index
    %122 = vector.load %arg3[%c8_39, %c16_40] : memref<16x64xf32, #tpu.memory_space<vmem>>, vector<8x16xf32>
    tpu.vector_store %arg3[%c8_39, %c16_40], %121 {strides = array<i32>} : memref<16x64xf32, #tpu.memory_space<vmem>>, vector<8x16xf32>,
    %123 = vector.extract_strided_slice %2 {offsets = [8, 32], sizes = [8, 16], strides = [1, 1]} : vector<16x192xf32> to vector<8x16xf32>
    %124 = vector.extract_strided_slice %2 {offsets = [8, 96], sizes = [8, 16], strides = [1, 1]} : vector<16x192xf32> to vector<8x16xf32>
    %125 = vector.extract_strided_slice %2 {offsets = [8, 160], sizes = [8, 16], strides = [1, 1]} : vector<16x192xf32> to vector<8x16xf32>
    %cst_41 = arith.constant dense<0.000000e+00> : vector<8x8xf32>
    %126 = tpu.matmul %123, %124, %cst_41 {dimension_numbers = #tpu.dot_dimension_numbers<[1], [1], [0], [0], [0, 0, 1, 0], [], []>} : vector<8x16xf32>, vector<8x16xf32>, vector<8x8xf32> -> vector<8x8xf32>
    %cst_42 = arith.constant dense<0xFF800000> : vector<8xf32>
    %127 = vector.multi_reduction <maximumf>, %126, %cst_42 [1] : vector<8x8xf32> to vector<8xf32>
    %128 = vector.shape_cast %127 : vector<8xf32> to vector<8x1xf32>
    %129 = vector.broadcast %128 : vector<8x1xf32> to vector<8x8xf32>
    %130 = arith.subf %126, %129 : vector<8x8xf32>
    %131 = math.exp %130 : vector<8x8xf32>
    %cst_43 = arith.constant dense<0.000000e+00> : vector<8x16xf32>
    %132 = tpu.matmul %131, %125, %cst_43 {dimension_numbers = #tpu.dot_dimension_numbers<[1], [0], [0], [1], [0, 0, 1, 1], [], []>} : vector<8x8xf32>, vector<8x16xf32>, vector<8x16xf32> -> vector<8x16xf32>
    %cst_44 = arith.constant dense<0.000000e+00> : vector<8xf32>
    %133 = vector.multi_reduction <add>, %131, %cst_44 [1] : vector<8x8xf32> to vector<8xf32>
    %134 = vector.shape_cast %133 : vector<8xf32> to vector<8x1xf32>
    %135 = tpu.reciprocal %134 {approx = true} : vector<8x1xf32> -> vector<8x1xf32>
    %136 = arith.mulf %134, %135 : vector<8x1xf32>
    %cst_45 = arith.constant 2.000000e+00 : f32
    %137 = vector.broadcast %cst_45 : f32 to vector<8x1xf32>
    %138 = arith.subf %137, %136 : vector<8x1xf32>
    %139 = arith.mulf %135, %138 : vector<8x1xf32>
    %140 = vector.broadcast %139 : vector<8x1xf32> to vector<8x16xf32>
    %141 = arith.mulf %132, %140 : vector<8x16xf32>
    %c8_46 = arith.constant 8 : index
    %c32_47 = arith.constant 32 : index
    %142 = vector.load %arg3[%c8_46, %c32_47] : memref<16x64xf32, #tpu.memory_space<vmem>>, vector<8x16xf32>
    tpu.vector_store %arg3[%c8_46, %c32_47], %141 {strides = array<i32>} : memref<16x64xf32, #tpu.memory_space<vmem>>, vector<8x16xf32>,
    %143 = vector.extract_strided_slice %2 {offsets = [8, 48], sizes = [8, 16], strides = [1, 1]} : vector<16x192xf32> to vector<8x16xf32>
    %144 = vector.extract_strided_slice %2 {offsets = [8, 112], sizes = [8, 16], strides = [1, 1]} : vector<16x192xf32> to vector<8x16xf32>
    %145 = vector.extract_strided_slice %2 {offsets = [8, 176], sizes = [8, 16], strides = [1, 1]} : vector<16x192xf32> to vector<8x16xf32>
    %cst_48 = arith.constant dense<0.000000e+00> : vector<8x8xf32>
    %146 = tpu.matmul %143, %144, %cst_48 {dimension_numbers = #tpu.dot_dimension_numbers<[1], [1], [0], [0], [0, 0, 1, 0], [], []>} : vector<8x16xf32>, vector<8x16xf32>, vector<8x8xf32> -> vector<8x8xf32>
    %cst_49 = arith.constant dense<0xFF800000> : vector<8xf32>
    %147 = vector.multi_reduction <maximumf>, %146, %cst_49 [1] : vector<8x8xf32> to vector<8xf32>
    %148 = vector.shape_cast %147 : vector<8xf32> to vector<8x1xf32>
    %149 = vector.broadcast %148 : vector<8x1xf32> to vector<8x8xf32>
    %150 = arith.subf %146, %149 : vector<8x8xf32>
    %151 = math.exp %150 : vector<8x8xf32>
    %cst_50 = arith.constant dense<0.000000e+00> : vector<8x16xf32>
    %152 = tpu.matmul %151, %145, %cst_50 {dimension_numbers = #tpu.dot_dimension_numbers<[1], [0], [0], [1], [0, 0, 1, 1], [], []>} : vector<8x8xf32>, vector<8x16xf32>, vector<8x16xf32> -> vector<8x16xf32>
    %cst_51 = arith.constant dense<0.000000e+00> : vector<8xf32>
    %153 = vector.multi_reduction <add>, %151, %cst_51 [1] : vector<8x8xf32> to vector<8xf32>
    %154 = vector.shape_cast %153 : vector<8xf32> to vector<8x1xf32>
    %155 = tpu.reciprocal %154 {approx = true} : vector<8x1xf32> -> vector<8x1xf32>
    %156 = arith.mulf %154, %155 : vector<8x1xf32>
    %cst_52 = arith.constant 2.000000e+00 : f32
    %157 = vector.broadcast %cst_52 : f32 to vector<8x1xf32>
    %158 = arith.subf %157, %156 : vector<8x1xf32>
    %159 = arith.mulf %155, %158 : vector<8x1xf32>
    %160 = vector.broadcast %159 : vector<8x1xf32> to vector<8x16xf32>
    %161 = arith.mulf %152, %160 : vector<8x16xf32>
    %c8_53 = arith.constant 8 : index
    %c48_54 = arith.constant 48 : index
    %162 = vector.load %arg3[%c8_53, %c48_54] : memref<16x64xf32, #tpu.memory_space<vmem>>, vector<8x16xf32>
    tpu.vector_store %arg3[%c8_53, %c48_54], %161 {strides = array<i32>} : memref<16x64xf32, #tpu.memory_space<vmem>>, vector<8x16xf32>,
    return
  }
  func.func @transform_0(%arg0: i32) -> (i32, i32) {
    %c0_i32 = arith.constant 0 : i32
    %c0_i32_0 = arith.constant 0 : i32
    %c0_i32_1 = arith.constant 0 : i32
    return %c0_i32, %c0_i32_0 : i32, i32
  }
  func.func @transform_1(%arg0: i32) -> (i32, i32) {
    %c0_i32 = arith.constant 0 : i32
    %c0_i32_0 = arith.constant 0 : i32
    %c0_i32_1 = arith.constant 0 : i32
    return %c0_i32, %c0_i32_0 : i32, i32
  }
  func.func @transform_2(%arg0: i32) -> (i32, i32) {
    %c0_i32 = arith.constant 0 : i32
    %c0_i32_0 = arith.constant 0 : i32
    %c0_i32_1 = arith.constant 0 : i32
    return %c0_i32, %c0_i32_0 : i32, i32
  }
}

</mosaic_0001>

<llo_original>
// kernel: tpu_custom_call.1
$region0: #{tpu_custom_call.1}
  #allocation0 [shape = 'u32[]', space=smem, size = 0x4, offset = 0x4, fixed_abs, tag = 'smem constant byte address 0x4 - core index']
  #allocation1 [shape = 'u32[144,128]{1,0:T(1,128)}', space=vmem, size = 0x12000, scoped, tag = 'internal scratch']
  %s0 = inlined_call_operand.hbm [shape: f32[16,32], index: 0, kind: input, shape index: {}]
  %s1 = inlined_call_operand.hbm [shape: f32[32,192], index: 1, kind: input, shape index: {}]
  %s2 = inlined_call_operand.hbm [shape: f32[16,64], index: 2, kind: output, shape index: {}]
  %s3 = sld [smem:[#allocation0]]
  $region26: #{tpu_custom_call.1} parent=0
    _
  %s5 = ssub.s32 1, %s3
  %s6 = scalar_select 0, %s5, %s3
  $region1: #{tpu_custom_call.1} parent=0
    #allocation2 [shape = 'u8[8192]{0}', space=vmem, size = 0x2000, scoped, tag = 'input window, operand 0, single buffered']
    #allocation3 [shape = 's32[1]{0}', space=sflag, size = 0x4, scoped, tag = 'scoped memory for tpu_custom_call.1']
    #allocation4 [shape = 's32[1]{0}', space=sflag, size = 0x4, scoped, tag = 'scoped memory for tpu_custom_call.1']
    #allocation5 [shape = 'u8[32768]{0}', space=vmem, size = 0x8000, scoped, tag = 'input window, operand 1, single buffered']
    #allocation6 [shape = 's32[1]{0}', space=sflag, size = 0x4, scoped, tag = 'scoped memory for tpu_custom_call.1']
    #allocation7 [shape = 'u8[8192]{0}', space=vmem, size = 0x2000, scoped, tag = 'output window, operand 0, single buffered']
    %7 = vsyncpa [#allocation3], 0
    %8 = vsyncpa [#allocation6], 0
    %9 = vsyncpa [#allocation4], 0
    // Predicated region
    $region2: #{tpu_custom_call.1} parent=1 // pred_check
      _
    $region3: #{tpu_custom_call.1} parent=1 // pred_check_branch
      %11 = sbr.rel (0) target = $region5
    $region4: #{tpu_custom_call.1} parent=1 // pred_region
      %s13 = ssub.s32 256, 256
      %14 = vsyncadd [#allocation3], %s13
      %s15 = sshll.u32 [#allocation2], 4
      %s16 = int_to_ptr.vmem [resolvable:$true] %s15
      %21 = dma.hbm_to_vmem [thread:$0]  %s0, 256, %s16, [#allocation3], 128, 128, 8
    $region5: #{tpu_custom_call.1} parent=1 // pred_fallthru
      _
    // Predicated region
    $region6: #{tpu_custom_call.1} parent=1 // pred_check
      _
    $region7: #{tpu_custom_call.1} parent=1 // pred_check_branch
      %23 = sbr.rel (0) target = $region9
    $region8: #{tpu_custom_call.1} parent=1 // pred_region
      %s25 = ssub.s32 1024, 1024
      %26 = vsyncadd [#allocation6], %s25
      %s27 = sshll.u32 [#allocation5], 4
      %s28 = int_to_ptr.vmem [resolvable:$true] %s27
      %33 = dma.hbm_to_vmem [thread:$0]  %s1, 1024, %s28, [#allocation6], 256, 256, 16
    $region9: #{tpu_custom_call.1} parent=1 // pred_fallthru
      _
    // Predicated region
    $region10: #{tpu_custom_call.1} parent=1 // pred_check
      _
    $region11: #{tpu_custom_call.1} parent=1 // pred_check_branch
      %35 = sbr.rel (0) target = $region13
    $region12: #{tpu_custom_call.1} parent=1 // pred_region
      %36 = dma.done [#allocation3], 256
    $region13: #{tpu_custom_call.1} parent=1 // pred_fallthru
      _
    // Predicated region
    $region14: #{tpu_custom_call.1} parent=1 // pred_check
      _
    $region15: #{tpu_custom_call.1} parent=1 // pred_check_branch
      %38 = sbr.rel (0) target = $region17
    $region16: #{tpu_custom_call.1} parent=1 // pred_region
      %39 = dma.done [#allocation6], 1024
    $region17: #{tpu_custom_call.1} parent=1 // pred_fallthru
      _
    %v40 = vld [vmem:[#allocation2] sm:$0xff]
    %v41 = vld [vmem:[#allocation2 + $0x8] sm:$0xff]
    %v42 = vld [vmem:[#allocation5] sm:$0xff]
    %v43 = vld [vmem:[#allocation5 + $0x8] sm:$0xff]
    %v44 = vld [vmem:[#allocation5 + $0x10] sm:$0xff]
    %v45 = vld [vmem:[#allocation5 + $0x18] sm:$0xff]
    %v46 = vld [vmem:[#allocation5 + $0x20] sm:$0xff]
    %v47 = vld [vmem:[#allocation5 + $0x28] sm:$0xff]
    %v48 = vld [vmem:[#allocation5 + $0x30] sm:$0xff]
    %v49 = vld [vmem:[#allocation5 + $0x38] sm:$0xff]
    %vm50 = vcmask 261120
    %v52 = vsel %vm50, %v40, 0
    %v55 = vsel %vm50, %v41, 0
    %57 = vmatprep.subr.mxu0 0.0
    %58 = vmatpush1.msra.mxu0 0.0
    %59 = vmatprep.subr.mxu0 0.0
    %60 = vmatpush1.msra.mxu0 0.0
    %61 = vmatprep.subr.mxu0 0.0
    %62 = vmatpush1.msra.mxu0 0.0
    %63 = vmatprep.subr.mxu0 0.0
    %64 = vmatpush1.msra.mxu0 0.0
    %65 = vmatprep.subr.mxu0 0.0
    %66 = vmatpush1.msra.mxu0 0.0
    %67 = vmatprep.subr.mxu0 0.0
    %68 = vmatpush1.msra.mxu0 0.0
    %69 = vmatprep.subr.mxu0 0.0
    %70 = vmatpush1.msra.mxu0 0.0
    %71 = vmatprep.subr.mxu0 0.0
    %72 = vmatpush1.msra.mxu0 0.0
    %73 = vmatprep.subr.mxu0 0.0
    %74 = vmatpush1.msra.mxu0 0.0
    %75 = vmatprep.subr.mxu0 0.0
    %76 = vmatpush1.msra.mxu0 0.0
    %77 = vmatprep.subr.mxu0 0.0
    %78 = vmatpush1.msra.mxu0 0.0
    %79 = vmatprep.subr.mxu0 0.0
    %80 = vmatpush1.msra.mxu0 0.0
    %81 = vmatprep.subr.mxu0 %v49
    %82 = vmatpush1.msra.mxu0 %v48
    %83 = vmatprep.subr.mxu0 %v47
    %84 = vmatpush1.msra.mxu0 %v46
    %85 = vmatprep.subr.mxu0 %v45
    %86 = vmatpush1.msra.mxu0 %v44
    %87 = vmatprep.subr.mxu0 %v43
    %88 = vmatpush1.msra.mxu0 %v42
    %89 = vmatprep.subr.mxu0 0.0
    %90 = vmatpush2.msra.mxu0 0.0
    %91 = vmatprep.subr.mxu0 0.0
    %92 = vmatpush2.msra.mxu0 0.0
    %93 = vmatprep.subr.mxu0 0.0
    %94 = vmatpush2.msra.mxu0 0.0
    %95 = vmatprep.subr.mxu0 0.0
    %96 = vmatpush2.msra.mxu0 0.0
    %97 = vmatprep.subr.mxu0 0.0
    %98 = vmatpush2.msra.mxu0 0.0
    %99 = vmatprep.subr.mxu0 0.0
    %100 = vmatpush2.msra.mxu0 0.0
    %101 = vmatprep.subr.mxu0 0.0
    %102 = vmatpush2.msra.mxu0 0.0
    %103 = vmatprep.subr.mxu0 0.0
    %104 = vmatpush2.msra.mxu0 0.0
    %105 = vmatprep.subr.mxu0 0.0
    %106 = vmatpush2.msra.mxu0 0.0
    %107 = vmatprep.subr.mxu0 0.0
    %108 = vmatpush2.msra.mxu0 0.0
    %109 = vmatprep.subr.mxu0 0.0
    %110 = vmatpush2.msra.mxu0 0.0
    %111 = vmatprep.subr.mxu0 0.0
    %112 = vmatpush2.msra.mxu0 0.0
    %113 = vmatprep.subr.mxu0 0.0
    %114 = vmatpush2.msra.mxu0 0.0
    %115 = vmatprep.subr.mxu0 0.0
    %116 = vmatpush2.msra.mxu0 0.0
    %117 = vmatprep.subr.mxu0 0.0
    %118 = vmatpush2.msra.mxu0 0.0
    %119 = vmatprep.subr.mxu0 0.0
    %120 = vmatpush2.msra.mxu0 0.0
    %121 = vmatprep.mubr.f32.mxu0 0.0
    %122 = vmatmul.mubr.f32.gmra.mxu0 %v52
    %v123 = vpop.f32.mrf.mxu0
    %v124 = vadd.f32 0.0, %v123
    %v125 = vpop.f32.mrf.mxu0
    %v126 = vadd.f32 0.0, %v125
    %127 = vmatprep.mubr.f32.mxu0 0.0
    %128 = vmatmul.mubr.f32.gmra.mxu0 %v55
    %v129 = vpop.f32.mrf.mxu0
    %v130 = vadd.f32 0.0, %v129
    %v131 = vpop.f32.mrf.mxu0
    %v132 = vadd.f32 0.0, %v131
    %133 = vdwg.mxu0
    %135 = vrot.lane.b32.xlu0 %v124, 64
    %v136 = vpop.permute.xlu0 %135
    %vm137 = vcmask 130048
    %v138 = vsel %vm137, %v124, 0
    %v140 = vsel %vm137, %v136, 0
    %142 = vmatprep.subr.mxu0 0.0
    %143 = vmatpush1.xpose.msra.mxu0 0.0
    %144 = vmatprep.subr.mxu0 0.0
    %145 = vmatpush1.xpose.msra.mxu0 0.0
    %146 = vmatprep.subr.mxu0 0.0
    %147 = vmatpush1.xpose.msra.mxu0 0.0
    %148 = vmatprep.subr.mxu0 0.0
    %149 = vmatpush1.xpose.msra.mxu0 0.0
    %150 = vmatprep.subr.mxu0 0.0
    %151 = vmatpush1.xpose.msra.mxu0 0.0
    %152 = vmatprep.subr.mxu0 0.0
    %153 = vmatpush1.xpose.msra.mxu0 0.0
    %154 = vmatprep.subr.mxu0 0.0
    %155 = vmatpush1.xpose.msra.mxu0 0.0
    %156 = vmatprep.subr.mxu0 0.0
    %157 = vmatpush1.xpose.msra.mxu0 0.0
    %158 = vmatprep.subr.mxu0 0.0
    %159 = vmatpush1.xpose.msra.mxu0 0.0
    %160 = vmatprep.subr.mxu0 0.0
    %161 = vmatpush1.xpose.msra.mxu0 0.0
    %162 = vmatprep.subr.mxu0 0.0
    %163 = vmatpush1.xpose.msra.mxu0 0.0
    %164 = vmatprep.subr.mxu0 0.0
    %165 = vmatpush1.xpose.msra.mxu0 0.0
    %166 = vmatprep.subr.mxu0 0.0
    %167 = vmatpush1.xpose.msra.mxu0 0.0
    %168 = vmatprep.subr.mxu0 0.0
    %169 = vmatpush1.xpose.msra.mxu0 0.0
    %170 = vmatprep.subr.mxu0 0.0
    %171 = vmatpush1.xpose.msra.mxu0 0.0
    %172 = vmatprep.subr.mxu0 0.0
    %173 = vmatpush1.xpose.msra.mxu0 %v140
    %174 = vmatprep.subr.mxu0 0.0
    %175 = vmatpush2.xpose.msra.mxu0 0.0
    %176 = vmatprep.subr.mxu0 0.0
    %177 = vmatpush2.xpose.msra.mxu0 0.0
    %178 = vmatprep.subr.mxu0 0.0
    %179 = vmatpush2.xpose.msra.mxu0 0.0
    %180 = vmatprep.subr.mxu0 0.0
    %181 = vmatpush2.xpose.msra.mxu0 0.0
    %182 = vmatprep.subr.mxu0 0.0
    %183 = vmatpush2.xpose.msra.mxu0 0.0
    %184 = vmatprep.subr.mxu0 0.0
    %185 = vmatpush2.xpose.msra.mxu0 0.0
    %186 = vmatprep.subr.mxu0 0.0
    %187 = vmatpush2.xpose.msra.mxu0 0.0
    %188 = vmatprep.subr.mxu0 0.0
    %189 = vmatpush2.xpose.msra.mxu0 0.0
    %190 = vmatprep.subr.mxu0 0.0
    %191 = vmatpush2.xpose.msra.mxu0 0.0
    %192 = vmatprep.subr.mxu0 0.0
    %193 = vmatpush2.xpose.msra.mxu0 0.0
    %194 = vmatprep.subr.mxu0 0.0
    %195 = vmatpush2.xpose.msra.mxu0 0.0
    %196 = vmatprep.subr.mxu0 0.0
    %197 = vmatpush2.xpose.msra.mxu0 0.0
    %198 = vmatprep.subr.mxu0 0.0
    %199 = vmatpush2.xpose.msra.mxu0 0.0
    %200 = vmatprep.subr.mxu0 0.0
    %201 = vmatpush2.xpose.msra.mxu0 0.0
    %202 = vmatprep.subr.mxu0 0.0
    %203 = vmatpush2.xpose.msra.mxu0 0.0
    %204 = vmatprep.subr.mxu0 0.0
    %205 = vmatpush2.xpose.msra.mxu0 0.0
    %206 = vmatprep.mubr.f32.mxu0 0.0
    %207 = vmatmul.mubr.f32.gmra.mxu0 %v138
    %v208 = vpop.f32.mrf.mxu0
    %v209 = vadd.f32 0.0, %v208
    %v210 = vpop.f32.mrf.mxu0
    %211 = vdwg.mxu0
    %vm212 = vcmask 64512
    %v213 = vsel %vm212, %v209, -inf
    %214 = vmax.xlane.f32.xlu0 %v213
    %v215 = vpop.xlane.xlu0 %214
    %v216 = vsub.f32 %v209, %v215
    %v217 = vmul.f32 %v216, 1.442695
    %v218 = vpow.pop %v217
    %v220 = vsel %vm212, %v218, 0
    %222 = vmatprep.subr.mxu0 0.0
    %223 = vmatpush1.msra.mxu0 0.0
    %224 = vmatprep.subr.mxu0 0.0
    %225 = vmatpush1.msra.mxu0 0.0
    %226 = vmatprep.subr.mxu0 0.0
    %227 = vmatpush1.msra.mxu0 0.0
    %228 = vmatprep.subr.mxu0 0.0
    %229 = vmatpush1.msra.mxu0 0.0
    %230 = vmatprep.subr.mxu0 0.0
    %231 = vmatpush1.msra.mxu0 0.0
    %232 = vmatprep.subr.mxu0 0.0
    %233 = vmatpush1.msra.mxu0 0.0
    %234 = vmatprep.subr.mxu0 0.0
    %235 = vmatpush1.msra.mxu0 0.0
    %236 = vmatprep.subr.mxu0 0.0
    %237 = vmatpush1.msra.mxu0 0.0
    %238 = vmatprep.subr.mxu0 0.0
    %239 = vmatpush1.msra.mxu0 0.0
    %240 = vmatprep.subr.mxu0 0.0
    %241 = vmatpush1.msra.mxu0 0.0
    %242 = vmatprep.subr.mxu0 0.0
    %243 = vmatpush1.msra.mxu0 0.0
    %244 = vmatprep.subr.mxu0 0.0
    %245 = vmatpush1.msra.mxu0 0.0
    %246 = vmatprep.subr.mxu0 0.0
    %247 = vmatpush1.msra.mxu0 0.0
    %248 = vmatprep.subr.mxu0 0.0
    %249 = vmatpush1.msra.mxu0 0.0
    %250 = vmatprep.subr.mxu0 0.0
    %251 = vmatpush1.msra.mxu0 0.0
    %252 = vmatprep.subr.mxu0 0.0
    %253 = vmatpush1.msra.mxu0 %v126
    %254 = vmatprep.subr.mxu0 0.0
    %255 = vmatpush2.msra.mxu0 0.0
    %256 = vmatprep.subr.mxu0 0.0
    %257 = vmatpush2.msra.mxu0 0.0
    %258 = vmatprep.subr.mxu0 0.0
    %259 = vmatpush2.msra.mxu0 0.0
    %260 = vmatprep.subr.mxu0 0.0
    %261 = vmatpush2.msra.mxu0 0.0
    %262 = vmatprep.subr.mxu0 0.0
    %263 = vmatpush2.msra.mxu0 0.0
    %264 = vmatprep.subr.mxu0 0.0
    %265 = vmatpush2.msra.mxu0 0.0
    %266 = vmatprep.subr.mxu0 0.0
    %267 = vmatpush2.msra.mxu0 0.0
    %268 = vmatprep.subr.mxu0 0.0
    %269 = vmatpush2.msra.mxu0 0.0
    %270 = vmatprep.subr.mxu0 0.0
    %271 = vmatpush2.msra.mxu0 0.0
    %272 = vmatprep.subr.mxu0 0.0
    %273 = vmatpush2.msra.mxu0 0.0
    %274 = vmatprep.subr.mxu0 0.0
    %275 = vmatpush2.msra.mxu0 0.0
    %276 = vmatprep.subr.mxu0 0.0
    %277 = vmatpush2.msra.mxu0 0.0
    %278 = vmatprep.subr.mxu0 0.0
    %279 = vmatpush2.msra.mxu0 0.0
    %280 = vmatprep.subr.mxu0 0.0
    %281 = vmatpush2.msra.mxu0 0.0
    %282 = vmatprep.subr.mxu0 0.0
    %283 = vmatpush2.msra.mxu0 0.0
    %284 = vmatprep.subr.mxu0 0.0
    %285 = vmatpush2.msra.mxu0 0.0
    %286 = vmatprep.mubr.f32.mxu0 0.0
    %287 = vmatmul.mubr.f32.gmra.mxu0 %v220
    %v288 = vpop.f32.mrf.mxu0
    %v289 = vadd.f32 0.0, %v288
    %v290 = vpop.f32.mrf.mxu0
    %291 = vdwg.mxu0
    %v292 = vsel %vm212, %v218, 0.0
    %293 = vadd.xlane.f32.xlu0 %v292
    %v294 = vpop.xlane.xlu0 %293
    %v295 = vrcp.pop %v294
    %v296 = vmul.f32 %v294, %v295
    %v297 = vsub.f32 2.0, %v296
    %v298 = vmul.f32 %v295, %v297
    %v299 = vmul.f32 %v289, %v298
    %300 = vst.msk [vmem:[#allocation7] sm:$0xff] %vm137, %v299
    %301 = vrot.lane.b32.xlu0 %v124, 112
    %v302 = vpop.permute.xlu0 %301
    %303 = vrot.lane.b32.xlu0 %v124, 48
    %v304 = vpop.permute.xlu0 %303
    %v305 = vsel %vm137, %v302, 0
    %v307 = vsel %vm137, %v304, 0
    %309 = vmatprep.subr.mxu0 0.0
    %310 = vmatpush1.xpose.msra.mxu0 0.0
    %311 = vmatprep.subr.mxu0 0.0
    %312 = vmatpush1.xpose.msra.mxu0 0.0
    %313 = vmatprep.subr.mxu0 0.0
    %314 = vmatpush1.xpose.msra.mxu0 0.0
    %315 = vmatprep.subr.mxu0 0.0
    %316 = vmatpush1.xpose.msra.mxu0 0.0
    %317 = vmatprep.subr.mxu0 0.0
    %318 = vmatpush1.xpose.msra.mxu0 0.0
    %319 = vmatprep.subr.mxu0 0.0
    %320 = vmatpush1.xpose.msra.mxu0 0.0
    %321 = vmatprep.subr.mxu0 0.0
    %322 = vmatpush1.xpose.msra.mxu0 0.0
    %323 = vmatprep.subr.mxu0 0.0
    %324 = vmatpush1.xpose.msra.mxu0 0.0
    %325 = vmatprep.subr.mxu0 0.0
    %326 = vmatpush1.xpose.msra.mxu0 0.0
    %327 = vmatprep.subr.mxu0 0.0
    %328 = vmatpush1.xpose.msra.mxu0 0.0
    %329 = vmatprep.subr.mxu0 0.0
    %330 = vmatpush1.xpose.msra.mxu0 0.0
    %331 = vmatprep.subr.mxu0 0.0
    %332 = vmatpush1.xpose.msra.mxu0 0.0
    %333 = vmatprep.subr.mxu0 0.0
    %334 = vmatpush1.xpose.msra.mxu0 0.0
    %335 = vmatprep.subr.mxu0 0.0
    %336 = vmatpush1.xpose.msra.mxu0 0.0
    %337 = vmatprep.subr.mxu0 0.0
    %338 = vmatpush1.xpose.msra.mxu0 0.0
    %339 = vmatprep.subr.mxu0 0.0
    %340 = vmatpush1.xpose.msra.mxu0 %v307
    %341 = vmatprep.subr.mxu0 0.0
    %342 = vmatpush2.xpose.msra.mxu0 0.0
    %343 = vmatprep.subr.mxu0 0.0
    %344 = vmatpush2.xpose.msra.mxu0 0.0
    %345 = vmatprep.subr.mxu0 0.0
    %346 = vmatpush2.xpose.msra.mxu0 0.0
    %347 = vmatprep.subr.mxu0 0.0
    %348 = vmatpush2.xpose.msra.mxu0 0.0
    %349 = vmatprep.subr.mxu0 0.0
    %350 = vmatpush2.xpose.msra.mxu0 0.0
    %351 = vmatprep.subr.mxu0 0.0
    %352 = vmatpush2.xpose.msra.mxu0 0.0
    %353 = vmatprep.subr.mxu0 0.0
    %354 = vmatpush2.xpose.msra.mxu0 0.0
    %355 = vmatprep.subr.mxu0 0.0
    %356 = vmatpush2.xpose.msra.mxu0 0.0
    %357 = vmatprep.subr.mxu0 0.0
    %358 = vmatpush2.xpose.msra.mxu0 0.0
    %359 = vmatprep.subr.mxu0 0.0
    %360 = vmatpush2.xpose.msra.mxu0 0.0
    %361 = vmatprep.subr.mxu0 0.0
    %362 = vmatpush2.xpose.msra.mxu0 0.0
    %363 = vmatprep.subr.mxu0 0.0
    %364 = vmatpush2.xpose.msra.mxu0 0.0
    %365 = vmatprep.subr.mxu0 0.0
    %366 = vmatpush2.xpose.msra.mxu0 0.0
    %367 = vmatprep.subr.mxu0 0.0
    %368 = vmatpush2.xpose.msra.mxu0 0.0
    %369 = vmatprep.subr.mxu0 0.0
    %370 = vmatpush2.xpose.msra.mxu0 0.0
    %371 = vmatprep.subr.mxu0 0.0
    %372 = vmatpush2.xpose.msra.mxu0 0.0
    %373 = vmatprep.mubr.f32.mxu0 0.0
    %374 = vmatmul.mubr.f32.gmra.mxu0 %v305
    %v375 = vpop.f32.mrf.mxu0
    %v376 = vadd.f32 0.0, %v375
    %v377 = vpop.f32.mrf.mxu0
    %378 = vdwg.mxu0
    %v379 = vsel %vm212, %v376, -inf
    %380 = vmax.xlane.f32.xlu0 %v379
    %v381 = vpop.xlane.xlu0 %380
    %v382 = vsub.f32 %v376, %v381
    %v383 = vmul.f32 %v382, 1.442695
    %v384 = vpow.pop %v383
    %386 = vrot.lane.b32.xlu0 %v126, 112
    %v387 = vpop.permute.xlu0 %386
    %v390 = vsel %vm212, %v384, 0
    %392 = vmatprep.subr.mxu0 0.0
    %393 = vmatpush1.msra.mxu0 0.0
    %394 = vmatprep.subr.mxu0 0.0
    %395 = vmatpush1.msra.mxu0 0.0
    %396 = vmatprep.subr.mxu0 0.0
    %397 = vmatpush1.msra.mxu0 0.0
    %398 = vmatprep.subr.mxu0 0.0
    %399 = vmatpush1.msra.mxu0 0.0
    %400 = vmatprep.subr.mxu0 0.0
    %401 = vmatpush1.msra.mxu0 0.0
    %402 = vmatprep.subr.mxu0 0.0
    %403 = vmatpush1.msra.mxu0 0.0
    %404 = vmatprep.subr.mxu0 0.0
    %405 = vmatpush1.msra.mxu0 0.0
    %406 = vmatprep.subr.mxu0 0.0
    %407 = vmatpush1.msra.mxu0 0.0
    %408 = vmatprep.subr.mxu0 0.0
    %409 = vmatpush1.msra.mxu0 0.0
    %410 = vmatprep.subr.mxu0 0.0
    %411 = vmatpush1.msra.mxu0 0.0
    %412 = vmatprep.subr.mxu0 0.0
    %413 = vmatpush1.msra.mxu0 0.0
    %414 = vmatprep.subr.mxu0 0.0
    %415 = vmatpush1.msra.mxu0 0.0
    %416 = vmatprep.subr.mxu0 0.0
    %417 = vmatpush1.msra.mxu0 0.0
    %418 = vmatprep.subr.mxu0 0.0
    %419 = vmatpush1.msra.mxu0 0.0
    %420 = vmatprep.subr.mxu0 0.0
    %421 = vmatpush1.msra.mxu0 0.0
    %422 = vmatprep.subr.mxu0 0.0
    %423 = vmatpush1.msra.mxu0 %v387
    %424 = vmatprep.subr.mxu0 0.0
    %425 = vmatpush2.msra.mxu0 0.0
    %426 = vmatprep.subr.mxu0 0.0
    %427 = vmatpush2.msra.mxu0 0.0
    %428 = vmatprep.subr.mxu0 0.0
    %429 = vmatpush2.msra.mxu0 0.0
    %430 = vmatprep.subr.mxu0 0.0
    %431 = vmatpush2.msra.mxu0 0.0
    %432 = vmatprep.subr.mxu0 0.0
    %433 = vmatpush2.msra.mxu0 0.0
    %434 = vmatprep.subr.mxu0 0.0
    %435 = vmatpush2.msra.mxu0 0.0
    %436 = vmatprep.subr.mxu0 0.0
    %437 = vmatpush2.msra.mxu0 0.0
    %438 = vmatprep.subr.mxu0 0.0
    %439 = vmatpush2.msra.mxu0 0.0
    %440 = vmatprep.subr.mxu0 0.0
    %441 = vmatpush2.msra.mxu0 0.0
    %442 = vmatprep.subr.mxu0 0.0
    %443 = vmatpush2.msra.mxu0 0.0
    %444 = vmatprep.subr.mxu0 0.0
    %445 = vmatpush2.msra.mxu0 0.0
    %446 = vmatprep.subr.mxu0 0.0
    %447 = vmatpush2.msra.mxu0 0.0
    %448 = vmatprep.subr.mxu0 0.0
    %449 = vmatpush2.msra.mxu0 0.0
    %450 = vmatprep.subr.mxu0 0.0
    %451 = vmatpush2.msra.mxu0 0.0
    %452 = vmatprep.subr.mxu0 0.0
    %453 = vmatpush2.msra.mxu0 0.0
    %454 = vmatprep.subr.mxu0 0.0
    %455 = vmatpush2.msra.mxu0 0.0
    %456 = vmatprep.mubr.f32.mxu0 0.0
    %457 = vmatmul.mubr.f32.gmra.mxu0 %v390
    %v458 = vpop.f32.mrf.mxu0
    %v459 = vadd.f32 0.0, %v458
    %v460 = vpop.f32.mrf.mxu0
    %461 = vdwg.mxu0
    %v462 = vsel %vm212, %v384, 0.0
    %463 = vadd.xlane.f32.xlu0 %v462
    %v464 = vpop.xlane.xlu0 %463
    %v465 = vrcp.pop %v464
    %v466 = vmul.f32 %v464, %v465
    %v467 = vsub.f32 2.0, %v466
    %v468 = vmul.f32 %v465, %v467
    %v469 = vmul.f32 %v459, %v468
    %471 = vrot.lane.b32.xlu0 %v469, 16
    %v472 = vpop.permute.xlu0 %471
    %vm474 = vcmask 261248
    %475 = vst.msk [vmem:[#allocation7] sm:$0xff] %vm474, %v472
    %476 = vrot.lane.b32.xlu0 %v124, 96
    %v477 = vpop.permute.xlu0 %476
    %478 = vrot.lane.b32.xlu0 %v124, 32
    %v479 = vpop.permute.xlu0 %478
    %v480 = vsel %vm137, %v477, 0
    %v482 = vsel %vm137, %v479, 0
    %484 = vmatprep.subr.mxu0 0.0
    %485 = vmatpush1.xpose.msra.mxu0 0.0
    %486 = vmatprep.subr.mxu0 0.0
    %487 = vmatpush1.xpose.msra.mxu0 0.0
    %488 = vmatprep.subr.mxu0 0.0
    %489 = vmatpush1.xpose.msra.mxu0 0.0
    %490 = vmatprep.subr.mxu0 0.0
    %491 = vmatpush1.xpose.msra.mxu0 0.0
    %492 = vmatprep.subr.mxu0 0.0
    %493 = vmatpush1.xpose.msra.mxu0 0.0
    %494 = vmatprep.subr.mxu0 0.0
    %495 = vmatpush1.xpose.msra.mxu0 0.0
    %496 = vmatprep.subr.mxu0 0.0
    %497 = vmatpush1.xpose.msra.mxu0 0.0
    %498 = vmatprep.subr.mxu0 0.0
    %499 = vmatpush1.xpose.msra.mxu0 0.0
    %500 = vmatprep.subr.mxu0 0.0
    %501 = vmatpush1.xpose.msra.mxu0 0.0
    %502 = vmatprep.subr.mxu0 0.0
    %503 = vmatpush1.xpose.msra.mxu0 0.0
    %504 = vmatprep.subr.mxu0 0.0
    %505 = vmatpush1.xpose.msra.mxu0 0.0
    %506 = vmatprep.subr.mxu0 0.0
    %507 = vmatpush1.xpose.msra.mxu0 0.0
    %508 = vmatprep.subr.mxu0 0.0
    %509 = vmatpush1.xpose.msra.mxu0 0.0
    %510 = vmatprep.subr.mxu0 0.0
    %511 = vmatpush1.xpose.msra.mxu0 0.0
    %512 = vmatprep.subr.mxu0 0.0
    %513 = vmatpush1.xpose.msra.mxu0 0.0
    %514 = vmatprep.subr.mxu0 0.0
    %515 = vmatpush1.xpose.msra.mxu0 %v482
    %516 = vmatprep.subr.mxu0 0.0
    %517 = vmatpush2.xpose.msra.mxu0 0.0
    %518 = vmatprep.subr.mxu0 0.0
    %519 = vmatpush2.xpose.msra.mxu0 0.0
    %520 = vmatprep.subr.mxu0 0.0
    %521 = vmatpush2.xpose.msra.mxu0 0.0
    %522 = vmatprep.subr.mxu0 0.0
    %523 = vmatpush2.xpose.msra.mxu0 0.0
    %524 = vmatprep.subr.mxu0 0.0
    %525 = vmatpush2.xpose.msra.mxu0 0.0
    %526 = vmatprep.subr.mxu0 0.0
    %527 = vmatpush2.xpose.msra.mxu0 0.0
    %528 = vmatprep.subr.mxu0 0.0
    %529 = vmatpush2.xpose.msra.mxu0 0.0
    %530 = vmatprep.subr.mxu0 0.0
    %531 = vmatpush2.xpose.msra.mxu0 0.0
    %532 = vmatprep.subr.mxu0 0.0
    %533 = vmatpush2.xpose.msra.mxu0 0.0
    %534 = vmatprep.subr.mxu0 0.0
    %535 = vmatpush2.xpose.msra.mxu0 0.0
    %536 = vmatprep.subr.mxu0 0.0
    %537 = vmatpush2.xpose.msra.mxu0 0.0
    %538 = vmatprep.subr.mxu0 0.0
    %539 = vmatpush2.xpose.msra.mxu0 0.0
    %540 = vmatprep.subr.mxu0 0.0
    %541 = vmatpush2.xpose.msra.mxu0 0.0
    %542 = vmatprep.subr.mxu0 0.0
    %543 = vmatpush2.xpose.msra.mxu0 0.0
    %544 = vmatprep.subr.mxu0 0.0
    %545 = vmatpush2.xpose.msra.mxu0 0.0
    %546 = vmatprep.subr.mxu0 0.0
    %547 = vmatpush2.xpose.msra.mxu0 0.0
    %548 = vmatprep.mubr.f32.mxu0 0.0
    %549 = vmatmul.mubr.f32.gmra.mxu0 %v480
    %v550 = vpop.f32.mrf.mxu0
    %v551 = vadd.f32 0.0, %v550
    %v552 = vpop.f32.mrf.mxu0
    %553 = vdwg.mxu0
    %v554 = vsel %vm212, %v551, -inf
    %555 = vmax.xlane.f32.xlu0 %v554
    %v556 = vpop.xlane.xlu0 %555
    %v557 = vsub.f32 %v551, %v556
    %v558 = vmul.f32 %v557, 1.442695
    %v559 = vpow.pop %v558
    %560 = vrot.lane.b32.xlu0 %v126, 96
    %v561 = vpop.permute.xlu0 %560
    %v564 = vsel %vm212, %v559, 0
    %566 = vmatprep.subr.mxu0 0.0
    %567 = vmatpush1.msra.mxu0 0.0
    %568 = vmatprep.subr.mxu0 0.0
    %569 = vmatpush1.msra.mxu0 0.0
    %570 = vmatprep.subr.mxu0 0.0
    %571 = vmatpush1.msra.mxu0 0.0
    %572 = vmatprep.subr.mxu0 0.0
    %573 = vmatpush1.msra.mxu0 0.0
    %574 = vmatprep.subr.mxu0 0.0
    %575 = vmatpush1.msra.mxu0 0.0
    %576 = vmatprep.subr.mxu0 0.0
    %577 = vmatpush1.msra.mxu0 0.0
    %578 = vmatprep.subr.mxu0 0.0
    %579 = vmatpush1.msra.mxu0 0.0
    %580 = vmatprep.subr.mxu0 0.0
    %581 = vmatpush1.msra.mxu0 0.0
    %582 = vmatprep.subr.mxu0 0.0
    %583 = vmatpush1.msra.mxu0 0.0
    %584 = vmatprep.subr.mxu0 0.0
    %585 = vmatpush1.msra.mxu0 0.0
    %586 = vmatprep.subr.mxu0 0.0
    %587 = vmatpush1.msra.mxu0 0.0
    %588 = vmatprep.subr.mxu0 0.0
    %589 = vmatpush1.msra.mxu0 0.0
    %590 = vmatprep.subr.mxu0 0.0
    %591 = vmatpush1.msra.mxu0 0.0
    %592 = vmatprep.subr.mxu0 0.0
    %593 = vmatpush1.msra.mxu0 0.0
    %594 = vmatprep.subr.mxu0 0.0
    %595 = vmatpush1.msra.mxu0 0.0
    %596 = vmatprep.subr.mxu0 0.0
    %597 = vmatpush1.msra.mxu0 %v561
    %598 = vmatprep.subr.mxu0 0.0
    %599 = vmatpush2.msra.mxu0 0.0
    %600 = vmatprep.subr.mxu0 0.0
    %601 = vmatpush2.msra.mxu0 0.0
    %602 = vmatprep.subr.mxu0 0.0
    %603 = vmatpush2.msra.mxu0 0.0
    %604 = vmatprep.subr.mxu0 0.0
    %605 = vmatpush2.msra.mxu0 0.0
    %606 = vmatprep.subr.mxu0 0.0
    %607 = vmatpush2.msra.mxu0 0.0
    %608 = vmatprep.subr.mxu0 0.0
    %609 = vmatpush2.msra.mxu0 0.0
    %610 = vmatprep.subr.mxu0 0.0
    %611 = vmatpush2.msra.mxu0 0.0
    %612 = vmatprep.subr.mxu0 0.0
    %613 = vmatpush2.msra.mxu0 0.0
    %614 = vmatprep.subr.mxu0 0.0
    %615 = vmatpush2.msra.mxu0 0.0
    %616 = vmatprep.subr.mxu0 0.0
    %617 = vmatpush2.msra.mxu0 0.0
    %618 = vmatprep.subr.mxu0 0.0
    %619 = vmatpush2.msra.mxu0 0.0
    %620 = vmatprep.subr.mxu0 0.0
    %621 = vmatpush2.msra.mxu0 0.0
    %622 = vmatprep.subr.mxu0 0.0
    %623 = vmatpush2.msra.mxu0 0.0
    %624 = vmatprep.subr.mxu0 0.0
    %625 = vmatpush2.msra.mxu0 0.0
    %626 = vmatprep.subr.mxu0 0.0
    %627 = vmatpush2.msra.mxu0 0.0
    %628 = vmatprep.subr.mxu0 0.0
    %629 = vmatpush2.msra.mxu0 0.0
    %630 = vmatprep.mubr.f32.mxu0 0.0
    %631 = vmatmul.mubr.f32.gmra.mxu0 %v564
    %v632 = vpop.f32.mrf.mxu0
    %v633 = vadd.f32 0.0, %v632
    %v634 = vpop.f32.mrf.mxu0
    %635 = vdwg.mxu0
    %v636 = vsel %vm212, %v559, 0.0
    %637 = vadd.xlane.f32.xlu0 %v636
    %v638 = vpop.xlane.xlu0 %637
    %v639 = vrcp.pop %v638
    %v640 = vmul.f32 %v638, %v639
    %v641 = vsub.f32 2.0, %v640
    %v642 = vmul.f32 %v639, %v641
    %v643 = vmul.f32 %v633, %v642
    %645 = vrot.lane.b32.xlu0 %v643, 32
    %v646 = vpop.permute.xlu0 %645
    %vm648 = vcmask 392448
    %649 = vst.msk [vmem:[#allocation7] sm:$0xff] %vm648, %v646
    %650 = vrot.lane.b32.xlu0 %v124, 80
    %v651 = vpop.permute.xlu0 %650
    %652 = vrot.lane.b32.xlu0 %v124, 16
    %v653 = vpop.permute.xlu0 %652
    %v654 = vsel %vm137, %v651, 0
    %v656 = vsel %vm137, %v653, 0
    %658 = vmatprep.subr.mxu0 0.0
    %659 = vmatpush1.xpose.msra.mxu0 0.0
    %660 = vmatprep.subr.mxu0 0.0
    %661 = vmatpush1.xpose.msra.mxu0 0.0
    %662 = vmatprep.subr.mxu0 0.0
    %663 = vmatpush1.xpose.msra.mxu0 0.0
    %664 = vmatprep.subr.mxu0 0.0
    %665 = vmatpush1.xpose.msra.mxu0 0.0
    %666 = vmatprep.subr.mxu0 0.0
    %667 = vmatpush1.xpose.msra.mxu0 0.0
    %668 = vmatprep.subr.mxu0 0.0
    %669 = vmatpush1.xpose.msra.mxu0 0.0
    %670 = vmatprep.subr.mxu0 0.0
    %671 = vmatpush1.xpose.msra.mxu0 0.0
    %672 = vmatprep.subr.mxu0 0.0
    %673 = vmatpush1.xpose.msra.mxu0 0.0
    %674 = vmatprep.subr.mxu0 0.0
    %675 = vmatpush1.xpose.msra.mxu0 0.0
    %676 = vmatprep.subr.mxu0 0.0
    %677 = vmatpush1.xpose.msra.mxu0 0.0
    %678 = vmatprep.subr.mxu0 0.0
    %679 = vmatpush1.xpose.msra.mxu0 0.0
    %680 = vmatprep.subr.mxu0 0.0
    %681 = vmatpush1.xpose.msra.mxu0 0.0
    %682 = vmatprep.subr.mxu0 0.0
    %683 = vmatpush1.xpose.msra.mxu0 0.0
    %684 = vmatprep.subr.mxu0 0.0
    %685 = vmatpush1.xpose.msra.mxu0 0.0
    %686 = vmatprep.subr.mxu0 0.0
    %687 = vmatpush1.xpose.msra.mxu0 0.0
    %688 = vmatprep.subr.mxu0 0.0
    %689 = vmatpush1.xpose.msra.mxu0 %v656
    %690 = vmatprep.subr.mxu0 0.0
    %691 = vmatpush2.xpose.msra.mxu0 0.0
    %692 = vmatprep.subr.mxu0 0.0
    %693 = vmatpush2.xpose.msra.mxu0 0.0
    %694 = vmatprep.subr.mxu0 0.0
    %695 = vmatpush2.xpose.msra.mxu0 0.0
    %696 = vmatprep.subr.mxu0 0.0
    %697 = vmatpush2.xpose.msra.mxu0 0.0
    %698 = vmatprep.subr.mxu0 0.0
    %699 = vmatpush2.xpose.msra.mxu0 0.0
    %700 = vmatprep.subr.mxu0 0.0
    %701 = vmatpush2.xpose.msra.mxu0 0.0
    %702 = vmatprep.subr.mxu0 0.0
    %703 = vmatpush2.xpose.msra.mxu0 0.0
    %704 = vmatprep.subr.mxu0 0.0
    %705 = vmatpush2.xpose.msra.mxu0 0.0
    %706 = vmatprep.subr.mxu0 0.0
    %707 = vmatpush2.xpose.msra.mxu0 0.0
    %708 = vmatprep.subr.mxu0 0.0
    %709 = vmatpush2.xpose.msra.mxu0 0.0
    %710 = vmatprep.subr.mxu0 0.0
    %711 = vmatpush2.xpose.msra.mxu0 0.0
    %712 = vmatprep.subr.mxu0 0.0
    %713 = vmatpush2.xpose.msra.mxu0 0.0
    %714 = vmatprep.subr.mxu0 0.0
    %715 = vmatpush2.xpose.msra.mxu0 0.0
    %716 = vmatprep.subr.mxu0 0.0
    %717 = vmatpush2.xpose.msra.mxu0 0.0
    %718 = vmatprep.subr.mxu0 0.0
    %719 = vmatpush2.xpose.msra.mxu0 0.0
    %720 = vmatprep.subr.mxu0 0.0
    %721 = vmatpush2.xpose.msra.mxu0 0.0
    %722 = vmatprep.mubr.f32.mxu0 0.0
    %723 = vmatmul.mubr.f32.gmra.mxu0 %v654
    %v724 = vpop.f32.mrf.mxu0
    %v725 = vadd.f32 0.0, %v724
    %v726 = vpop.f32.mrf.mxu0
    %727 = vdwg.mxu0
    %v728 = vsel %vm212, %v725, -inf
    %729 = vmax.xlane.f32.xlu0 %v728
    %v730 = vpop.xlane.xlu0 %729
    %v731 = vsub.f32 %v725, %v730
    %v732 = vmul.f32 %v731, 1.442695
    %v733 = vpow.pop %v732
    %734 = vrot.lane.b32.xlu0 %v126, 80
    %v735 = vpop.permute.xlu0 %734
    %v738 = vsel %vm212, %v733, 0
    %740 = vmatprep.subr.mxu0 0.0
    %741 = vmatpush1.msra.mxu0 0.0
    %742 = vmatprep.subr.mxu0 0.0
    %743 = vmatpush1.msra.mxu0 0.0
    %744 = vmatprep.subr.mxu0 0.0
    %745 = vmatpush1.msra.mxu0 0.0
    %746 = vmatprep.subr.mxu0 0.0
    %747 = vmatpush1.msra.mxu0 0.0
    %748 = vmatprep.subr.mxu0 0.0
    %749 = vmatpush1.msra.mxu0 0.0
    %750 = vmatprep.subr.mxu0 0.0
    %751 = vmatpush1.msra.mxu0 0.0
    %752 = vmatprep.subr.mxu0 0.0
    %753 = vmatpush1.msra.mxu0 0.0
    %754 = vmatprep.subr.mxu0 0.0
    %755 = vmatpush1.msra.mxu0 0.0
    %756 = vmatprep.subr.mxu0 0.0
    %757 = vmatpush1.msra.mxu0 0.0
    %758 = vmatprep.subr.mxu0 0.0
    %759 = vmatpush1.msra.mxu0 0.0
    %760 = vmatprep.subr.mxu0 0.0
    %761 = vmatpush1.msra.mxu0 0.0
    %762 = vmatprep.subr.mxu0 0.0
    %763 = vmatpush1.msra.mxu0 0.0
    %764 = vmatprep.subr.mxu0 0.0
    %765 = vmatpush1.msra.mxu0 0.0
    %766 = vmatprep.subr.mxu0 0.0
    %767 = vmatpush1.msra.mxu0 0.0
    %768 = vmatprep.subr.mxu0 0.0
    %769 = vmatpush1.msra.mxu0 0.0
    %770 = vmatprep.subr.mxu0 0.0
    %771 = vmatpush1.msra.mxu0 %v735
    %772 = vmatprep.subr.mxu0 0.0
    %773 = vmatpush2.msra.mxu0 0.0
    %774 = vmatprep.subr.mxu0 0.0
    %775 = vmatpush2.msra.mxu0 0.0
    %776 = vmatprep.subr.mxu0 0.0
    %777 = vmatpush2.msra.mxu0 0.0
    %778 = vmatprep.subr.mxu0 0.0
    %779 = vmatpush2.msra.mxu0 0.0
    %780 = vmatprep.subr.mxu0 0.0
    %781 = vmatpush2.msra.mxu0 0.0
    %782 = vmatprep.subr.mxu0 0.0
    %783 = vmatpush2.msra.mxu0 0.0
    %784 = vmatprep.subr.mxu0 0.0
    %785 = vmatpush2.msra.mxu0 0.0
    %786 = vmatprep.subr.mxu0 0.0
    %787 = vmatpush2.msra.mxu0 0.0
    %788 = vmatprep.subr.mxu0 0.0
    %789 = vmatpush2.msra.mxu0 0.0
    %790 = vmatprep.subr.mxu0 0.0
    %791 = vmatpush2.msra.mxu0 0.0
    %792 = vmatprep.subr.mxu0 0.0
    %793 = vmatpush2.msra.mxu0 0.0
    %794 = vmatprep.subr.mxu0 0.0
    %795 = vmatpush2.msra.mxu0 0.0
    %796 = vmatprep.subr.mxu0 0.0
    %797 = vmatpush2.msra.mxu0 0.0
    %798 = vmatprep.subr.mxu0 0.0
    %799 = vmatpush2.msra.mxu0 0.0
    %800 = vmatprep.subr.mxu0 0.0
    %801 = vmatpush2.msra.mxu0 0.0
    %802 = vmatprep.subr.mxu0 0.0
    %803 = vmatpush2.msra.mxu0 0.0
    %804 = vmatprep.mubr.f32.mxu0 0.0
    %805 = vmatmul.mubr.f32.gmra.mxu0 %v738
    %v806 = vpop.f32.mrf.mxu0
    %v807 = vadd.f32 0.0, %v806
    %v808 = vpop.f32.mrf.mxu0
    %809 = vdwg.mxu0
    %v810 = vsel %vm212, %v733, 0.0
    %811 = vadd.xlane.f32.xlu0 %v810
    %v812 = vpop.xlane.xlu0 %811
    %v813 = vrcp.pop %v812
    %v814 = vmul.f32 %v812, %v813
    %v815 = vsub.f32 2.0, %v814
    %v816 = vmul.f32 %v813, %v815
    %v817 = vmul.f32 %v807, %v816
    %819 = vrot.lane.b32.xlu0 %v817, 48
    %v820 = vpop.permute.xlu0 %819
    %vm822 = vcmask 523648
    %823 = vst.msk [vmem:[#allocation7] sm:$0xff] %vm822, %v820
    %825 = vrot.lane.b32.xlu0 %v130, 64
    %v826 = vpop.permute.xlu0 %825
    %v827 = vsel %vm137, %v130, 0
    %v829 = vsel %vm137, %v826, 0
    %831 = vmatprep.subr.mxu0 0.0
    %832 = vmatpush1.xpose.msra.mxu0 0.0
    %833 = vmatprep.subr.mxu0 0.0
    %834 = vmatpush1.xpose.msra.mxu0 0.0
    %835 = vmatprep.subr.mxu0 0.0
    %836 = vmatpush1.xpose.msra.mxu0 0.0
    %837 = vmatprep.subr.mxu0 0.0
    %838 = vmatpush1.xpose.msra.mxu0 0.0
    %839 = vmatprep.subr.mxu0 0.0
    %840 = vmatpush1.xpose.msra.mxu0 0.0
    %841 = vmatprep.subr.mxu0 0.0
    %842 = vmatpush1.xpose.msra.mxu0 0.0
    %843 = vmatprep.subr.mxu0 0.0
    %844 = vmatpush1.xpose.msra.mxu0 0.0
    %845 = vmatprep.subr.mxu0 0.0
    %846 = vmatpush1.xpose.msra.mxu0 0.0
    %847 = vmatprep.subr.mxu0 0.0
    %848 = vmatpush1.xpose.msra.mxu0 0.0
    %849 = vmatprep.subr.mxu0 0.0
    %850 = vmatpush1.xpose.msra.mxu0 0.0
    %851 = vmatprep.subr.mxu0 0.0
    %852 = vmatpush1.xpose.msra.mxu0 0.0
    %853 = vmatprep.subr.mxu0 0.0
    %854 = vmatpush1.xpose.msra.mxu0 0.0
    %855 = vmatprep.subr.mxu0 0.0
    %856 = vmatpush1.xpose.msra.mxu0 0.0
    %857 = vmatprep.subr.mxu0 0.0
    %858 = vmatpush1.xpose.msra.mxu0 0.0
    %859 = vmatprep.subr.mxu0 0.0
    %860 = vmatpush1.xpose.msra.mxu0 0.0
    %861 = vmatprep.subr.mxu0 0.0
    %862 = vmatpush1.xpose.msra.mxu0 %v829
    %863 = vmatprep.subr.mxu0 0.0
    %864 = vmatpush2.xpose.msra.mxu0 0.0
    %865 = vmatprep.subr.mxu0 0.0
    %866 = vmatpush2.xpose.msra.mxu0 0.0
    %867 = vmatprep.subr.mxu0 0.0
    %868 = vmatpush2.xpose.msra.mxu0 0.0
    %869 = vmatprep.subr.mxu0 0.0
    %870 = vmatpush2.xpose.msra.mxu0 0.0
    %871 = vmatprep.subr.mxu0 0.0
    %872 = vmatpush2.xpose.msra.mxu0 0.0
    %873 = vmatprep.subr.mxu0 0.0
    %874 = vmatpush2.xpose.msra.mxu0 0.0
    %875 = vmatprep.subr.mxu0 0.0
    %876 = vmatpush2.xpose.msra.mxu0 0.0
    %877 = vmatprep.subr.mxu0 0.0
    %878 = vmatpush2.xpose.msra.mxu0 0.0
    %879 = vmatprep.subr.mxu0 0.0
    %880 = vmatpush2.xpose.msra.mxu0 0.0
    %881 = vmatprep.subr.mxu0 0.0
    %882 = vmatpush2.xpose.msra.mxu0 0.0
    %883 = vmatprep.subr.mxu0 0.0
    %884 = vmatpush2.xpose.msra.mxu0 0.0
    %885 = vmatprep.subr.mxu0 0.0
    %886 = vmatpush2.xpose.msra.mxu0 0.0
    %887 = vmatprep.subr.mxu0 0.0
    %888 = vmatpush2.xpose.msra.mxu0 0.0
    %889 = vmatprep.subr.mxu0 0.0
    %890 = vmatpush2.xpose.msra.mxu0 0.0
    %891 = vmatprep.subr.mxu0 0.0
    %892 = vmatpush2.xpose.msra.mxu0 0.0
    %893 = vmatprep.subr.mxu0 0.0
    %894 = vmatpush2.xpose.msra.mxu0 0.0
    %895 = vmatprep.mubr.f32.mxu0 0.0
    %896 = vmatmul.mubr.f32.gmra.mxu0 %v827
    %v897 = vpop.f32.mrf.mxu0
    %v898 = vadd.f32 0.0, %v897
    %v899 = vpop.f32.mrf.mxu0
    %900 = vdwg.mxu0
    %v901 = vsel %vm212, %v898, -inf
    %902 = vmax.xlane.f32.xlu0 %v901
    %v903 = vpop.xlane.xlu0 %902
    %v904 = vsub.f32 %v898, %v903
    %v905 = vmul.f32 %v904, 1.442695
    %v906 = vpow.pop %v905
    %v908 = vsel %vm212, %v906, 0
    %910 = vmatprep.subr.mxu0 0.0
    %911 = vmatpush1.msra.mxu0 0.0
    %912 = vmatprep.subr.mxu0 0.0
    %913 = vmatpush1.msra.mxu0 0.0
    %914 = vmatprep.subr.mxu0 0.0
    %915 = vmatpush1.msra.mxu0 0.0
    %916 = vmatprep.subr.mxu0 0.0
    %917 = vmatpush1.msra.mxu0 0.0
    %918 = vmatprep.subr.mxu0 0.0
    %919 = vmatpush1.msra.mxu0 0.0
    %920 = vmatprep.subr.mxu0 0.0
    %921 = vmatpush1.msra.mxu0 0.0
    %922 = vmatprep.subr.mxu0 0.0
    %923 = vmatpush1.msra.mxu0 0.0
    %924 = vmatprep.subr.mxu0 0.0
    %925 = vmatpush1.msra.mxu0 0.0
    %926 = vmatprep.subr.mxu0 0.0
    %927 = vmatpush1.msra.mxu0 0.0
    %928 = vmatprep.subr.mxu0 0.0
    %929 = vmatpush1.msra.mxu0 0.0
    %930 = vmatprep.subr.mxu0 0.0
    %931 = vmatpush1.msra.mxu0 0.0
    %932 = vmatprep.subr.mxu0 0.0
    %933 = vmatpush1.msra.mxu0 0.0
    %934 = vmatprep.subr.mxu0 0.0
    %935 = vmatpush1.msra.mxu0 0.0
    %936 = vmatprep.subr.mxu0 0.0
    %937 = vmatpush1.msra.mxu0 0.0
    %938 = vmatprep.subr.mxu0 0.0
    %939 = vmatpush1.msra.mxu0 0.0
    %940 = vmatprep.subr.mxu0 0.0
    %941 = vmatpush1.msra.mxu0 %v132
    %942 = vmatprep.subr.mxu0 0.0
    %943 = vmatpush2.msra.mxu0 0.0
    %944 = vmatprep.subr.mxu0 0.0
    %945 = vmatpush2.msra.mxu0 0.0
    %946 = vmatprep.subr.mxu0 0.0
    %947 = vmatpush2.msra.mxu0 0.0
    %948 = vmatprep.subr.mxu0 0.0
    %949 = vmatpush2.msra.mxu0 0.0
    %950 = vmatprep.subr.mxu0 0.0
    %951 = vmatpush2.msra.mxu0 0.0
    %952 = vmatprep.subr.mxu0 0.0
    %953 = vmatpush2.msra.mxu0 0.0
    %954 = vmatprep.subr.mxu0 0.0
    %955 = vmatpush2.msra.mxu0 0.0
    %956 = vmatprep.subr.mxu0 0.0
    %957 = vmatpush2.msra.mxu0 0.0
    %958 = vmatprep.subr.mxu0 0.0
    %959 = vmatpush2.msra.mxu0 0.0
    %960 = vmatprep.subr.mxu0 0.0
    %961 = vmatpush2.msra.mxu0 0.0
    %962 = vmatprep.subr.mxu0 0.0
    %963 = vmatpush2.msra.mxu0 0.0
    %964 = vmatprep.subr.mxu0 0.0
    %965 = vmatpush2.msra.mxu0 0.0
    %966 = vmatprep.subr.mxu0 0.0
    %967 = vmatpush2.msra.mxu0 0.0
    %968 = vmatprep.subr.mxu0 0.0
    %969 = vmatpush2.msra.mxu0 0.0
    %970 = vmatprep.subr.mxu0 0.0
    %971 = vmatpush2.msra.mxu0 0.0
    %972 = vmatprep.subr.mxu0 0.0
    %973 = vmatpush2.msra.mxu0 0.0
    %974 = vmatprep.mubr.f32.mxu0 0.0
    %975 = vmatmul.mubr.f32.gmra.mxu0 %v908
    %v976 = vpop.f32.mrf.mxu0
    %v977 = vadd.f32 0.0, %v976
    %v978 = vpop.f32.mrf.mxu0
    %979 = vdwg.mxu0
    %v980 = vsel %vm212, %v906, 0.0
    %981 = vadd.xlane.f32.xlu0 %v980
    %v982 = vpop.xlane.xlu0 %981
    %v983 = vrcp.pop %v982
    %v984 = vmul.f32 %v982, %v983
    %v985 = vsub.f32 2.0, %v984
    %v986 = vmul.f32 %v983, %v985
    %v987 = vmul.f32 %v977, %v986
    %988 = vst.msk [vmem:[#allocation7 + $0x8] sm:$0xff] %vm137, %v987
    %989 = vrot.lane.b32.xlu0 %v130, 112
    %v990 = vpop.permute.xlu0 %989
    %991 = vrot.lane.b32.xlu0 %v130, 48
    %v992 = vpop.permute.xlu0 %991
    %v993 = vsel %vm137, %v990, 0
    %v995 = vsel %vm137, %v992, 0
    %997 = vmatprep.subr.mxu0 0.0
    %998 = vmatpush1.xpose.msra.mxu0 0.0
    %999 = vmatprep.subr.mxu0 0.0
    %1000 = vmatpush1.xpose.msra.mxu0 0.0
    %1001 = vmatprep.subr.mxu0 0.0
    %1002 = vmatpush1.xpose.msra.mxu0 0.0
    %1003 = vmatprep.subr.mxu0 0.0
    %1004 = vmatpush1.xpose.msra.mxu0 0.0
    %1005 = vmatprep.subr.mxu0 0.0
    %1006 = vmatpush1.xpose.msra.mxu0 0.0
    %1007 = vmatprep.subr.mxu0 0.0
    %1008 = vmatpush1.xpose.msra.mxu0 0.0
    %1009 = vmatprep.subr.mxu0 0.0
    %1010 = vmatpush1.xpose.msra.mxu0 0.0
    %1011 = vmatprep.subr.mxu0 0.0
    %1012 = vmatpush1.xpose.msra.mxu0 0.0
    %1013 = vmatprep.subr.mxu0 0.0
    %1014 = vmatpush1.xpose.msra.mxu0 0.0
    %1015 = vmatprep.subr.mxu0 0.0
    %1016 = vmatpush1.xpose.msra.mxu0 0.0
    %1017 = vmatprep.subr.mxu0 0.0
    %1018 = vmatpush1.xpose.msra.mxu0 0.0
    %1019 = vmatprep.subr.mxu0 0.0
    %1020 = vmatpush1.xpose.msra.mxu0 0.0
    %1021 = vmatprep.subr.mxu0 0.0
    %1022 = vmatpush1.xpose.msra.mxu0 0.0
    %1023 = vmatprep.subr.mxu0 0.0
    %1024 = vmatpush1.xpose.msra.mxu0 0.0
    %1025 = vmatprep.subr.mxu0 0.0
    %1026 = vmatpush1.xpose.msra.mxu0 0.0
    %1027 = vmatprep.subr.mxu0 0.0
    %1028 = vmatpush1.xpose.msra.mxu0 %v995
    %1029 = vmatprep.subr.mxu0 0.0
    %1030 = vmatpush2.xpose.msra.mxu0 0.0
    %1031 = vmatprep.subr.mxu0 0.0
    %1032 = vmatpush2.xpose.msra.mxu0 0.0
    %1033 = vmatprep.subr.mxu0 0.0
    %1034 = vmatpush2.xpose.msra.mxu0 0.0
    %1035 = vmatprep.subr.mxu0 0.0
    %1036 = vmatpush2.xpose.msra.mxu0 0.0
    %1037 = vmatprep.subr.mxu0 0.0
    %1038 = vmatpush2.xpose.msra.mxu0 0.0
    %1039 = vmatprep.subr.mxu0 0.0
    %1040 = vmatpush2.xpose.msra.mxu0 0.0
    %1041 = vmatprep.subr.mxu0 0.0
    %1042 = vmatpush2.xpose.msra.mxu0 0.0
    %1043 = vmatprep.subr.mxu0 0.0
    %1044 = vmatpush2.xpose.msra.mxu0 0.0
    %1045 = vmatprep.subr.mxu0 0.0
    %1046 = vmatpush2.xpose.msra.mxu0 0.0
    %1047 = vmatprep.subr.mxu0 0.0
    %1048 = vmatpush2.xpose.msra.mxu0 0.0
    %1049 = vmatprep.subr.mxu0 0.0
    %1050 = vmatpush2.xpose.msra.mxu0 0.0
    %1051 = vmatprep.subr.mxu0 0.0
    %1052 = vmatpush2.xpose.msra.mxu0 0.0
    %1053 = vmatprep.subr.mxu0 0.0
    %1054 = vmatpush2.xpose.msra.mxu0 0.0
    %1055 = vmatprep.subr.mxu0 0.0
    %1056 = vmatpush2.xpose.msra.mxu0 0.0
    %1057 = vmatprep.subr.mxu0 0.0
    %1058 = vmatpush2.xpose.msra.mxu0 0.0
    %1059 = vmatprep.subr.mxu0 0.0
    %1060 = vmatpush2.xpose.msra.mxu0 0.0
    %1061 = vmatprep.mubr.f32.mxu0 0.0
    %1062 = vmatmul.mubr.f32.gmra.mxu0 %v993
    %v1063 = vpop.f32.mrf.mxu0
    %v1064 = vadd.f32 0.0, %v1063
    %v1065 = vpop.f32.mrf.mxu0
    %1066 = vdwg.mxu0
    %v1067 = vsel %vm212, %v1064, -inf
    %1068 = vmax.xlane.f32.xlu0 %v1067
    %v1069 = vpop.xlane.xlu0 %1068
    %v1070 = vsub.f32 %v1064, %v1069
    %v1071 = vmul.f32 %v1070, 1.442695
    %v1072 = vpow.pop %v1071
    %1074 = vrot.lane.b32.xlu0 %v132, 112
    %v1075 = vpop.permute.xlu0 %1074
    %v1078 = vsel %vm212, %v1072, 0
    %1080 = vmatprep.subr.mxu0 0.0
    %1081 = vmatpush1.msra.mxu0 0.0
    %1082 = vmatprep.subr.mxu0 0.0
    %1083 = vmatpush1.msra.mxu0 0.0
    %1084 = vmatprep.subr.mxu0 0.0
    %1085 = vmatpush1.msra.mxu0 0.0
    %1086 = vmatprep.subr.mxu0 0.0
    %1087 = vmatpush1.msra.mxu0 0.0
    %1088 = vmatprep.subr.mxu0 0.0
    %1089 = vmatpush1.msra.mxu0 0.0
    %1090 = vmatprep.subr.mxu0 0.0
    %1091 = vmatpush1.msra.mxu0 0.0
    %1092 = vmatprep.subr.mxu0 0.0
    %1093 = vmatpush1.msra.mxu0 0.0
    %1094 = vmatprep.subr.mxu0 0.0
    %1095 = vmatpush1.msra.mxu0 0.0
    %1096 = vmatprep.subr.mxu0 0.0
    %1097 = vmatpush1.msra.mxu0 0.0
    %1098 = vmatprep.subr.mxu0 0.0
    %1099 = vmatpush1.msra.mxu0 0.0
    %1100 = vmatprep.subr.mxu0 0.0
    %1101 = vmatpush1.msra.mxu0 0.0
    %1102 = vmatprep.subr.mxu0 0.0
    %1103 = vmatpush1.msra.mxu0 0.0
    %1104 = vmatprep.subr.mxu0 0.0
    %1105 = vmatpush1.msra.mxu0 0.0
    %1106 = vmatprep.subr.mxu0 0.0
    %1107 = vmatpush1.msra.mxu0 0.0
    %1108 = vmatprep.subr.mxu0 0.0
    %1109 = vmatpush1.msra.mxu0 0.0
    %1110 = vmatprep.subr.mxu0 0.0
    %1111 = vmatpush1.msra.mxu0 %v1075
    %1112 = vmatprep.subr.mxu0 0.0
    %1113 = vmatpush2.msra.mxu0 0.0
    %1114 = vmatprep.subr.mxu0 0.0
    %1115 = vmatpush2.msra.mxu0 0.0
    %1116 = vmatprep.subr.mxu0 0.0
    %1117 = vmatpush2.msra.mxu0 0.0
    %1118 = vmatprep.subr.mxu0 0.0
    %1119 = vmatpush2.msra.mxu0 0.0
    %1120 = vmatprep.subr.mxu0 0.0
    %1121 = vmatpush2.msra.mxu0 0.0
    %1122 = vmatprep.subr.mxu0 0.0
    %1123 = vmatpush2.msra.mxu0 0.0
    %1124 = vmatprep.subr.mxu0 0.0
    %1125 = vmatpush2.msra.mxu0 0.0
    %1126 = vmatprep.subr.mxu0 0.0
    %1127 = vmatpush2.msra.mxu0 0.0
    %1128 = vmatprep.subr.mxu0 0.0
    %1129 = vmatpush2.msra.mxu0 0.0
    %1130 = vmatprep.subr.mxu0 0.0
    %1131 = vmatpush2.msra.mxu0 0.0
    %1132 = vmatprep.subr.mxu0 0.0
    %1133 = vmatpush2.msra.mxu0 0.0
    %1134 = vmatprep.subr.mxu0 0.0
    %1135 = vmatpush2.msra.mxu0 0.0
    %1136 = vmatprep.subr.mxu0 0.0
    %1137 = vmatpush2.msra.mxu0 0.0
    %1138 = vmatprep.subr.mxu0 0.0
    %1139 = vmatpush2.msra.mxu0 0.0
    %1140 = vmatprep.subr.mxu0 0.0
    %1141 = vmatpush2.msra.mxu0 0.0
    %1142 = vmatprep.subr.mxu0 0.0
    %1143 = vmatpush2.msra.mxu0 0.0
    %1144 = vmatprep.mubr.f32.mxu0 0.0
    %1145 = vmatmul.mubr.f32.gmra.mxu0 %v1078
    %v1146 = vpop.f32.mrf.mxu0
    %v1147 = vadd.f32 0.0, %v1146
    %v1148 = vpop.f32.mrf.mxu0
    %1149 = vdwg.mxu0
    %v1150 = vsel %vm212, %v1072, 0.0
    %1151 = vadd.xlane.f32.xlu0 %v1150
    %v1152 = vpop.xlane.xlu0 %1151
    %v1153 = vrcp.pop %v1152
    %v1154 = vmul.f32 %v1152, %v1153
    %v1155 = vsub.f32 2.0, %v1154
    %v1156 = vmul.f32 %v1153, %v1155
    %v1157 = vmul.f32 %v1147, %v1156
    %1159 = vrot.lane.b32.xlu0 %v1157, 16
    %v1160 = vpop.permute.xlu0 %1159
    %1162 = vst.msk [vmem:[#allocation7 + $0x8] sm:$0xff] %vm474, %v1160
    %1163 = vrot.lane.b32.xlu0 %v130, 96
    %v1164 = vpop.permute.xlu0 %1163
    %1165 = vrot.lane.b32.xlu0 %v130, 32
    %v1166 = vpop.permute.xlu0 %1165
    %v1167 = vsel %vm137, %v1164, 0
    %v1169 = vsel %vm137, %v1166, 0
    %1171 = vmatprep.subr.mxu0 0.0
    %1172 = vmatpush1.xpose.msra.mxu0 0.0
    %1173 = vmatprep.subr.mxu0 0.0
    %1174 = vmatpush1.xpose.msra.mxu0 0.0
    %1175 = vmatprep.subr.mxu0 0.0
    %1176 = vmatpush1.xpose.msra.mxu0 0.0
    %1177 = vmatprep.subr.mxu0 0.0
    %1178 = vmatpush1.xpose.msra.mxu0 0.0
    %1179 = vmatprep.subr.mxu0 0.0
    %1180 = vmatpush1.xpose.msra.mxu0 0.0
    %1181 = vmatprep.subr.mxu0 0.0
    %1182 = vmatpush1.xpose.msra.mxu0 0.0
    %1183 = vmatprep.subr.mxu0 0.0
    %1184 = vmatpush1.xpose.msra.mxu0 0.0
    %1185 = vmatprep.subr.mxu0 0.0
    %1186 = vmatpush1.xpose.msra.mxu0 0.0
    %1187 = vmatprep.subr.mxu0 0.0
    %1188 = vmatpush1.xpose.msra.mxu0 0.0
    %1189 = vmatprep.subr.mxu0 0.0
    %1190 = vmatpush1.xpose.msra.mxu0 0.0
    %1191 = vmatprep.subr.mxu0 0.0
    %1192 = vmatpush1.xpose.msra.mxu0 0.0
    %1193 = vmatprep.subr.mxu0 0.0
    %1194 = vmatpush1.xpose.msra.mxu0 0.0
    %1195 = vmatprep.subr.mxu0 0.0
    %1196 = vmatpush1.xpose.msra.mxu0 0.0
    %1197 = vmatprep.subr.mxu0 0.0
    %1198 = vmatpush1.xpose.msra.mxu0 0.0
    %1199 = vmatprep.subr.mxu0 0.0
    %1200 = vmatpush1.xpose.msra.mxu0 0.0
    %1201 = vmatprep.subr.mxu0 0.0
    %1202 = vmatpush1.xpose.msra.mxu0 %v1169
    %1203 = vmatprep.subr.mxu0 0.0
    %1204 = vmatpush2.xpose.msra.mxu0 0.0
    %1205 = vmatprep.subr.mxu0 0.0
    %1206 = vmatpush2.xpose.msra.mxu0 0.0
    %1207 = vmatprep.subr.mxu0 0.0
    %1208 = vmatpush2.xpose.msra.mxu0 0.0
    %1209 = vmatprep.subr.mxu0 0.0
    %1210 = vmatpush2.xpose.msra.mxu0 0.0
    %1211 = vmatprep.subr.mxu0 0.0
    %1212 = vmatpush2.xpose.msra.mxu0 0.0
    %1213 = vmatprep.subr.mxu0 0.0
    %1214 = vmatpush2.xpose.msra.mxu0 0.0
    %1215 = vmatprep.subr.mxu0 0.0
    %1216 = vmatpush2.xpose.msra.mxu0 0.0
    %1217 = vmatprep.subr.mxu0 0.0
    %1218 = vmatpush2.xpose.msra.mxu0 0.0
    %1219 = vmatprep.subr.mxu0 0.0
    %1220 = vmatpush2.xpose.msra.mxu0 0.0
    %1221 = vmatprep.subr.mxu0 0.0
    %1222 = vmatpush2.xpose.msra.mxu0 0.0
    %1223 = vmatprep.subr.mxu0 0.0
    %1224 = vmatpush2.xpose.msra.mxu0 0.0
    %1225 = vmatprep.subr.mxu0 0.0
    %1226 = vmatpush2.xpose.msra.mxu0 0.0
    %1227 = vmatprep.subr.mxu0 0.0
    %1228 = vmatpush2.xpose.msra.mxu0 0.0
    %1229 = vmatprep.subr.mxu0 0.0
    %1230 = vmatpush2.xpose.msra.mxu0 0.0
    %1231 = vmatprep.subr.mxu0 0.0
    %1232 = vmatpush2.xpose.msra.mxu0 0.0
    %1233 = vmatprep.subr.mxu0 0.0
    %1234 = vmatpush2.xpose.msra.mxu0 0.0
    %1235 = vmatprep.mubr.f32.mxu0 0.0
    %1236 = vmatmul.mubr.f32.gmra.mxu0 %v1167
    %v1237 = vpop.f32.mrf.mxu0
    %v1238 = vadd.f32 0.0, %v1237
    %v1239 = vpop.f32.mrf.mxu0
    %1240 = vdwg.mxu0
    %v1241 = vsel %vm212, %v1238, -inf
    %1242 = vmax.xlane.f32.xlu0 %v1241
    %v1243 = vpop.xlane.xlu0 %1242
    %v1244 = vsub.f32 %v1238, %v1243
    %v1245 = vmul.f32 %v1244, 1.442695
    %v1246 = vpow.pop %v1245
    %1247 = vrot.lane.b32.xlu0 %v132, 96
    %v1248 = vpop.permute.xlu0 %1247
    %v1251 = vsel %vm212, %v1246, 0
    %1253 = vmatprep.subr.mxu0 0.0
    %1254 = vmatpush1.msra.mxu0 0.0
    %1255 = vmatprep.subr.mxu0 0.0
    %1256 = vmatpush1.msra.mxu0 0.0
    %1257 = vmatprep.subr.mxu0 0.0
    %1258 = vmatpush1.msra.mxu0 0.0
    %1259 = vmatprep.subr.mxu0 0.0
    %1260 = vmatpush1.msra.mxu0 0.0
    %1261 = vmatprep.subr.mxu0 0.0
    %1262 = vmatpush1.msra.mxu0 0.0
    %1263 = vmatprep.subr.mxu0 0.0
    %1264 = vmatpush1.msra.mxu0 0.0
    %1265 = vmatprep.subr.mxu0 0.0
    %1266 = vmatpush1.msra.mxu0 0.0
    %1267 = vmatprep.subr.mxu0 0.0
    %1268 = vmatpush1.msra.mxu0 0.0
    %1269 = vmatprep.subr.mxu0 0.0
    %1270 = vmatpush1.msra.mxu0 0.0
    %1271 = vmatprep.subr.mxu0 0.0
    %1272 = vmatpush1.msra.mxu0 0.0
    %1273 = vmatprep.subr.mxu0 0.0
    %1274 = vmatpush1.msra.mxu0 0.0
    %1275 = vmatprep.subr.mxu0 0.0
    %1276 = vmatpush1.msra.mxu0 0.0
    %1277 = vmatprep.subr.mxu0 0.0
    %1278 = vmatpush1.msra.mxu0 0.0
    %1279 = vmatprep.subr.mxu0 0.0
    %1280 = vmatpush1.msra.mxu0 0.0
    %1281 = vmatprep.subr.mxu0 0.0
    %1282 = vmatpush1.msra.mxu0 0.0
    %1283 = vmatprep.subr.mxu0 0.0
    %1284 = vmatpush1.msra.mxu0 %v1248
    %1285 = vmatprep.subr.mxu0 0.0
    %1286 = vmatpush2.msra.mxu0 0.0
    %1287 = vmatprep.subr.mxu0 0.0
    %1288 = vmatpush2.msra.mxu0 0.0
    %1289 = vmatprep.subr.mxu0 0.0
    %1290 = vmatpush2.msra.mxu0 0.0
    %1291 = vmatprep.subr.mxu0 0.0
    %1292 = vmatpush2.msra.mxu0 0.0
    %1293 = vmatprep.subr.mxu0 0.0
    %1294 = vmatpush2.msra.mxu0 0.0
    %1295 = vmatprep.subr.mxu0 0.0
    %1296 = vmatpush2.msra.mxu0 0.0
    %1297 = vmatprep.subr.mxu0 0.0
    %1298 = vmatpush2.msra.mxu0 0.0
    %1299 = vmatprep.subr.mxu0 0.0
    %1300 = vmatpush2.msra.mxu0 0.0
    %1301 = vmatprep.subr.mxu0 0.0
    %1302 = vmatpush2.msra.mxu0 0.0
    %1303 = vmatprep.subr.mxu0 0.0
    %1304 = vmatpush2.msra.mxu0 0.0
    %1305 = vmatprep.subr.mxu0 0.0
    %1306 = vmatpush2.msra.mxu0 0.0
    %1307 = vmatprep.subr.mxu0 0.0
    %1308 = vmatpush2.msra.mxu0 0.0
    %1309 = vmatprep.subr.mxu0 0.0
    %1310 = vmatpush2.msra.mxu0 0.0
    %1311 = vmatprep.subr.mxu0 0.0
    %1312 = vmatpush2.msra.mxu0 0.0
    %1313 = vmatprep.subr.mxu0 0.0
    %1314 = vmatpush2.msra.mxu0 0.0
    %1315 = vmatprep.subr.mxu0 0.0
    %1316 = vmatpush2.msra.mxu0 0.0
    %1317 = vmatprep.mubr.f32.mxu0 0.0
    %1318 = vmatmul.mubr.f32.gmra.mxu0 %v1251
    %v1319 = vpop.f32.mrf.mxu0
    %v1320 = vadd.f32 0.0, %v1319
    %v1321 = vpop.f32.mrf.mxu0
    %1322 = vdwg.mxu0
    %v1323 = vsel %vm212, %v1246, 0.0
    %1324 = vadd.xlane.f32.xlu0 %v1323
    %v1325 = vpop.xlane.xlu0 %1324
    %v1326 = vrcp.pop %v1325
    %v1327 = vmul.f32 %v1325, %v1326
    %v1328 = vsub.f32 2.0, %v1327
    %v1329 = vmul.f32 %v1326, %v1328
    %v1330 = vmul.f32 %v1320, %v1329
    %1332 = vrot.lane.b32.xlu0 %v1330, 32
    %v1333 = vpop.permute.xlu0 %1332
    %1335 = vst.msk [vmem:[#allocation7 + $0x8] sm:$0xff] %vm648, %v1333
    %1336 = vrot.lane.b32.xlu0 %v130, 80
    %v1337 = vpop.permute.xlu0 %1336
    %1338 = vrot.lane.b32.xlu0 %v130, 16
    %v1339 = vpop.permute.xlu0 %1338
    %v1340 = vsel %vm137, %v1337, 0
    %v1342 = vsel %vm137, %v1339, 0
    %1344 = vmatprep.subr.mxu0 0.0
    %1345 = vmatpush1.xpose.msra.mxu0 0.0
    %1346 = vmatprep.subr.mxu0 0.0
    %1347 = vmatpush1.xpose.msra.mxu0 0.0
    %1348 = vmatprep.subr.mxu0 0.0
    %1349 = vmatpush1.xpose.msra.mxu0 0.0
    %1350 = vmatprep.subr.mxu0 0.0
    %1351 = vmatpush1.xpose.msra.mxu0 0.0
    %1352 = vmatprep.subr.mxu0 0.0
    %1353 = vmatpush1.xpose.msra.mxu0 0.0
    %1354 = vmatprep.subr.mxu0 0.0
    %1355 = vmatpush1.xpose.msra.mxu0 0.0
    %1356 = vmatprep.subr.mxu0 0.0
    %1357 = vmatpush1.xpose.msra.mxu0 0.0
    %1358 = vmatprep.subr.mxu0 0.0
    %1359 = vmatpush1.xpose.msra.mxu0 0.0
    %1360 = vmatprep.subr.mxu0 0.0
    %1361 = vmatpush1.xpose.msra.mxu0 0.0
    %1362 = vmatprep.subr.mxu0 0.0
    %1363 = vmatpush1.xpose.msra.mxu0 0.0
    %1364 = vmatprep.subr.mxu0 0.0
    %1365 = vmatpush1.xpose.msra.mxu0 0.0
    %1366 = vmatprep.subr.mxu0 0.0
    %1367 = vmatpush1.xpose.msra.mxu0 0.0
    %1368 = vmatprep.subr.mxu0 0.0
    %1369 = vmatpush1.xpose.msra.mxu0 0.0
    %1370 = vmatprep.subr.mxu0 0.0
    %1371 = vmatpush1.xpose.msra.mxu0 0.0
    %1372 = vmatprep.subr.mxu0 0.0
    %1373 = vmatpush1.xpose.msra.mxu0 0.0
    %1374 = vmatprep.subr.mxu0 0.0
    %1375 = vmatpush1.xpose.msra.mxu0 %v1342
    %1376 = vmatprep.subr.mxu0 0.0
    %1377 = vmatpush2.xpose.msra.mxu0 0.0
    %1378 = vmatprep.subr.mxu0 0.0
    %1379 = vmatpush2.xpose.msra.mxu0 0.0
    %1380 = vmatprep.subr.mxu0 0.0
    %1381 = vmatpush2.xpose.msra.mxu0 0.0
    %1382 = vmatprep.subr.mxu0 0.0
    %1383 = vmatpush2.xpose.msra.mxu0 0.0
    %1384 = vmatprep.subr.mxu0 0.0
    %1385 = vmatpush2.xpose.msra.mxu0 0.0
    %1386 = vmatprep.subr.mxu0 0.0
    %1387 = vmatpush2.xpose.msra.mxu0 0.0
    %1388 = vmatprep.subr.mxu0 0.0
    %1389 = vmatpush2.xpose.msra.mxu0 0.0
    %1390 = vmatprep.subr.mxu0 0.0
    %1391 = vmatpush2.xpose.msra.mxu0 0.0
    %1392 = vmatprep.subr.mxu0 0.0
    %1393 = vmatpush2.xpose.msra.mxu0 0.0
    %1394 = vmatprep.subr.mxu0 0.0
    %1395 = vmatpush2.xpose.msra.mxu0 0.0
    %1396 = vmatprep.subr.mxu0 0.0
    %1397 = vmatpush2.xpose.msra.mxu0 0.0
    %1398 = vmatprep.subr.mxu0 0.0
    %1399 = vmatpush2.xpose.msra.mxu0 0.0
    %1400 = vmatprep.subr.mxu0 0.0
    %1401 = vmatpush2.xpose.msra.mxu0 0.0
    %1402 = vmatprep.subr.mxu0 0.0
    %1403 = vmatpush2.xpose.msra.mxu0 0.0
    %1404 = vmatprep.subr.mxu0 0.0
    %1405 = vmatpush2.xpose.msra.mxu0 0.0
    %1406 = vmatprep.subr.mxu0 0.0
    %1407 = vmatpush2.xpose.msra.mxu0 0.0
    %1408 = vmatprep.mubr.f32.mxu0 0.0
    %1409 = vmatmul.mubr.f32.gmra.mxu0 %v1340
    %v1410 = vpop.f32.mrf.mxu0
    %v1411 = vadd.f32 0.0, %v1410
    %v1412 = vpop.f32.mrf.mxu0
    %1413 = vdwg.mxu0
    %v1414 = vsel %vm212, %v1411, -inf
    %1415 = vmax.xlane.f32.xlu0 %v1414
    %v1416 = vpop.xlane.xlu0 %1415
    %v1417 = vsub.f32 %v1411, %v1416
    %v1418 = vmul.f32 %v1417, 1.442695
    %v1419 = vpow.pop %v1418
    %1420 = vrot.lane.b32.xlu0 %v132, 80
    %v1421 = vpop.permute.xlu0 %1420
    %v1424 = vsel %vm212, %v1419, 0
    %1426 = vmatprep.subr.mxu0 0.0
    %1427 = vmatpush1.msra.mxu0 0.0
    %1428 = vmatprep.subr.mxu0 0.0
    %1429 = vmatpush1.msra.mxu0 0.0
    %1430 = vmatprep.subr.mxu0 0.0
    %1431 = vmatpush1.msra.mxu0 0.0
    %1432 = vmatprep.subr.mxu0 0.0
    %1433 = vmatpush1.msra.mxu0 0.0
    %1434 = vmatprep.subr.mxu0 0.0
    %1435 = vmatpush1.msra.mxu0 0.0
    %1436 = vmatprep.subr.mxu0 0.0
    %1437 = vmatpush1.msra.mxu0 0.0
    %1438 = vmatprep.subr.mxu0 0.0
    %1439 = vmatpush1.msra.mxu0 0.0
    %1440 = vmatprep.subr.mxu0 0.0
    %1441 = vmatpush1.msra.mxu0 0.0
    %1442 = vmatprep.subr.mxu0 0.0
    %1443 = vmatpush1.msra.mxu0 0.0
    %1444 = vmatprep.subr.mxu0 0.0
    %1445 = vmatpush1.msra.mxu0 0.0
    %1446 = vmatprep.subr.mxu0 0.0
    %1447 = vmatpush1.msra.mxu0 0.0
    %1448 = vmatprep.subr.mxu0 0.0
    %1449 = vmatpush1.msra.mxu0 0.0
    %1450 = vmatprep.subr.mxu0 0.0
    %1451 = vmatpush1.msra.mxu0 0.0
    %1452 = vmatprep.subr.mxu0 0.0
    %1453 = vmatpush1.msra.mxu0 0.0
    %1454 = vmatprep.subr.mxu0 0.0
    %1455 = vmatpush1.msra.mxu0 0.0
    %1456 = vmatprep.subr.mxu0 0.0
    %1457 = vmatpush1.msra.mxu0 %v1421
    %1458 = vmatprep.subr.mxu0 0.0
    %1459 = vmatpush2.msra.mxu0 0.0
    %1460 = vmatprep.subr.mxu0 0.0
    %1461 = vmatpush2.msra.mxu0 0.0
    %1462 = vmatprep.subr.mxu0 0.0
    %1463 = vmatpush2.msra.mxu0 0.0
    %1464 = vmatprep.subr.mxu0 0.0
    %1465 = vmatpush2.msra.mxu0 0.0
    %1466 = vmatprep.subr.mxu0 0.0
    %1467 = vmatpush2.msra.mxu0 0.0
    %1468 = vmatprep.subr.mxu0 0.0
    %1469 = vmatpush2.msra.mxu0 0.0
    %1470 = vmatprep.subr.mxu0 0.0
    %1471 = vmatpush2.msra.mxu0 0.0
    %1472 = vmatprep.subr.mxu0 0.0
    %1473 = vmatpush2.msra.mxu0 0.0
    %1474 = vmatprep.subr.mxu0 0.0
    %1475 = vmatpush2.msra.mxu0 0.0
    %1476 = vmatprep.subr.mxu0 0.0
    %1477 = vmatpush2.msra.mxu0 0.0
    %1478 = vmatprep.subr.mxu0 0.0
    %1479 = vmatpush2.msra.mxu0 0.0
    %1480 = vmatprep.subr.mxu0 0.0
    %1481 = vmatpush2.msra.mxu0 0.0
    %1482 = vmatprep.subr.mxu0 0.0
    %1483 = vmatpush2.msra.mxu0 0.0
    %1484 = vmatprep.subr.mxu0 0.0
    %1485 = vmatpush2.msra.mxu0 0.0
    %1486 = vmatprep.subr.mxu0 0.0
    %1487 = vmatpush2.msra.mxu0 0.0
    %1488 = vmatprep.subr.mxu0 0.0
    %1489 = vmatpush2.msra.mxu0 0.0
    %1490 = vmatprep.mubr.f32.mxu0 0.0
    %1491 = vmatmul.mubr.f32.gmra.mxu0 %v1424
    %v1492 = vpop.f32.mrf.mxu0
    %v1493 = vadd.f32 0.0, %v1492
    %v1494 = vpop.f32.mrf.mxu0
    %1495 = vdwg.mxu0
    %v1496 = vsel %vm212, %v1419, 0.0
    %1497 = vadd.xlane.f32.xlu0 %v1496
    %v1498 = vpop.xlane.xlu0 %1497
    %v1499 = vrcp.pop %v1498
    %v1500 = vmul.f32 %v1498, %v1499
    %v1501 = vsub.f32 2.0, %v1500
    %v1502 = vmul.f32 %v1499, %v1501
    %v1503 = vmul.f32 %v1493, %v1502
    %1505 = vrot.lane.b32.xlu0 %v1503, 48
    %v1506 = vpop.permute.xlu0 %1505
    %1508 = vst.msk [vmem:[#allocation7 + $0x8] sm:$0xff] %vm822, %v1506
    // Predicated region
    $region18: #{tpu_custom_call.1} parent=1 // pred_check
      _
    $region19: #{tpu_custom_call.1} parent=1 // pred_check_branch
      %1510 = sbr.rel (0) target = $region21
    $region20: #{tpu_custom_call.1} parent=1 // pred_region
      %s1512 = ssub.s32 256, 256
      %1513 = vsyncadd [#allocation4], %s1512
      %s1514 = sshll.u32 [#allocation7], 4
      %s1515 = int_to_ptr.vmem [resolvable:$true] %s1514
      %1520 = dma.vmem_to_hbm [thread:$0]  %s1515, 256, %s2, [#allocation4], 128, 128, 8
    $region21: #{tpu_custom_call.1} parent=1 // pred_fallthru
      _
    // Predicated region
    $region22: #{tpu_custom_call.1} parent=1 // pred_check
      _
    $region23: #{tpu_custom_call.1} parent=1 // pred_check_branch
      %1522 = sbr.rel (0) target = $region25
    $region24: #{tpu_custom_call.1} parent=1 // pred_region
      %1523 = dma.done [#allocation4], 256
    $region25: #{tpu_custom_call.1} parent=1 // pred_fallthru
      _
    %1524 = vsyncpa [#allocation3], 1
    %1525 = vsyncpa [#allocation6], 1
    %1526 = vsyncpa [#allocation4], 1

</llo_original>
